<compile_context>
chip_gen: v7x
topology: tpu7x:2x2x1
jax: 0.10.0
libtpu: 0.0.40
codegen_flags: <defaults>
</compile_context>

<pallas_src>
import functools

import jax
import jax.numpy as jnp
from jax.experimental import pallas as pl
from jax.experimental.pallas import tpu as pltpu

BINS = 16
OUT_DIM = 64
OUT_PAD = 128   # pad FC output to a full 128-lane vreg -> unmasked stores
CHUNK = 512     # lanes processed per inner step (bounds vreg live ranges)


def _count_chunk(xc, oob):
    """Per-bin pixel counts for one chunk.

    xc : (rows, csz) f32 pixel values.
    oob: None, or (rows, csz) bool marking lanes past the end of the image row.
    Returns (rows, BINS) int32 counts.  Matches the PyTorch module: x > 1 falls
    in no bin, x == 1 in the last bin, x < 0 in no bin.
    """
    if oob is not None:
        xc = jnp.where(oob, 2.0, xc)            # sentinel > 1.0 -> lands in no bin
    # One bin index per pixel (x*16 and floor are exact for power-of-two bins).
    bi = jnp.floor(xc * BINS)
    bi = jnp.minimum(bi, float(BINS - 1))       # x == 1.0 -> last bin (torch)
    bi = jnp.where(xc > 1.0, -1.0, bi)          # x > 1.0  -> no bin (torch)
    # x < 0 gives bi < 0 which never matches any bin index, matching torch.
    parts = [jnp.sum((bi == float(b)).astype(jnp.int32), axis=-1, keepdims=True)
             for b in range(BINS)]              # each (rows, 1) int32
    return jnp.concatenate(parts, axis=-1)      # (rows, BINS) int32


def _hist_fc_kernel(x_ref, w_ref, b_ref, o_ref, cnt_ref, *,
                    sub_hw, tile_hw, bt, G, needs_mask):
    """Grid = (batch_blocks [parallel], pixel_blocks [arbitrary]).

    x_ref  : (1, rows, tile_hw) f32, rows = 3*bt*G, row = (lb*3 + c)*G + g
    w_ref  : (3*BINS, OUT_PAD)  f32, pre-scaled by 1/(H*W), row = c*BINS + bin
    b_ref  : (1, OUT_PAD)       f32
    o_ref  : (1, bt, OUT_PAD)   f32
    cnt_ref: (rows, BINS)       f32 scratch -- raw per-(sub-row, bin) counts
    """
    k = pl.program_id(1)
    nk = pl.num_programs(1)
    rows = 3 * bt * G
    n_full = tile_hw // CHUNK
    rem = tile_hw % CHUNK

    @pl.when(k == 0)
    def _init():
        cnt_ref[...] = jnp.zeros_like(cnt_ref)

    def accumulate(masked):
        def oob_mask(col0, csz):
            if not masked:
                return None
            lane = jax.lax.broadcasted_iota(jnp.int32, (rows, csz), 1)
            return (col0 + lane) >= sub_hw

        acc = jnp.zeros((rows, BINS), jnp.int32)
        if n_full == 1:
            acc = acc + _count_chunk(x_ref[0, :, :CHUNK],
                                     oob_mask(k * tile_hw, CHUNK))
        elif n_full > 1:
            def body(ci, a):
                start = pl.multiple_of(ci * CHUNK, CHUNK)
                xc = x_ref[0, :, pl.ds(start, CHUNK)]
                return a + _count_chunk(xc, oob_mask(k * tile_hw + start, CHUNK))
            acc = jax.lax.fori_loop(0, n_full, body, acc)
        if rem:
            xc = x_ref[0, :, n_full * CHUNK:]
            acc = acc + _count_chunk(xc, oob_mask(k * tile_hw + n_full * CHUNK, rem))
        cnt_ref[...] += acc.astype(jnp.float32)

    if not needs_mask:
        accumulate(False)
    else:
        # Only the (uneven) last pixel block pays for the lane mask.
        @pl.when(k < nk - 1)
        def _full_tiles():
            accumulate(False)

        @pl.when(k == nk - 1)
        def _last_tile():
            accumulate(True)

    @pl.when(k == nk - 1)
    def _fc():
        # Fold the G sub-rows and build the (bt, 3*BINS) histogram in torch's
        # [r|g|b] feature order using static slices + sublane sums only.
        cnt = cnt_ref[...]                                   # (rows, BINS)
        hist_rows = []
        for lb in range(bt):
            feats = [jnp.sum(cnt[(lb * 3 + c) * G:(lb * 3 + c + 1) * G, :],
                             axis=0, keepdims=True) for c in range(3)]
            hist_rows.append(jnp.concatenate(feats, axis=-1))   # (1, 3*BINS)
        hist = hist_rows[0] if bt == 1 else jnp.concatenate(hist_rows, axis=0)
        # Tiny FC (48 features) as 48 broadcast FMAs on the VPU: exact f32 and
        # negligible at bt <= 8 (an MXU f32 dot would need multi-pass HIGHEST).
        w = w_ref[...]                                       # 1/(H*W) folded in
        out = jnp.zeros((bt, OUT_PAD), jnp.float32) + b_ref[...]
        for f in range(3 * BINS):
            out = out + hist[:, f:f + 1] * w[f:f + 1, :]
        # TODO(synk): training-mode Dropout(0.1) not implemented (eval identity).
        o_ref[0] = jnp.maximum(out, 0.0)


def _choose_tiling(B, HW):
    """Pick (bt, G): batches per block and per-channel pixel fold.

    rows = 3*bt*G should fill the 8 sublanes of a vreg, and the parallel batch
    axis should keep >= 2 blocks when possible (both TensorCores on v7x).
    """
    best_score, best = -1.0, (B, 1)
    for bt in range(1, B + 1):
        if B % bt:
            continue
        for G in (8, 4, 2, 1):
            if HW % G:
                continue
            rows = 3 * bt * G
            if rows > 32:                       # bound per-chunk vreg footprint
                continue
            sub_hw = HW // G
            nb = B // bt
            sublane_fill = rows / (8.0 * (-(-rows // 8)))
            lanes = min(sub_hw, CHUNK)
            lane_fill = lanes / (128.0 * (-(-lanes // 128)))
            score = sublane_fill * lane_fill * (1.4 if nb >= 2 else 1.0)
            if score > best_score + 1e-9:
                best_score, best = score, (bt, G)
    return best


def _choose_tile_hw(sub_hw):
    """Pixel-axis tile: the full row when it fits in one block, else the
    multiple of 128 in [512, 4096] minimizing steps * (step overhead + tile)."""
    if sub_hw <= 4096:
        return sub_hw, 1, False
    best_key, best = None, None
    for t in range(4096, 511, -128):
        nk = -(-sub_hw // t)
        masked = (sub_hw % t) != 0
        key = (nk * (1536 + t), masked, -t)
        if best_key is None or key < best_key:
            best_key, best = key, (t, nk, masked)
    return best


def color_histogram_layer(x, w_t, b):
    """x: (B, 3, H, W); w_t: (3*BINS, OUT_DIM); b: (OUT_DIM,). Returns (B, OUT_DIM)."""
    B, C, H, W = x.shape
    assert C == 3
    HW = H * W

    bt, G = _choose_tiling(B, HW)
    rows = 3 * bt * G
    sub_hw = HW // G
    nb = B // bt
    tile_hw, nk, needs_mask = _choose_tile_hw(sub_hw)

    # (B,3,H,W) -> (nb, rows, sub_hw): free reshape, row = (lb*3 + c)*G + g.
    x3 = x.reshape(nb, rows, sub_hw).astype(jnp.float32)

    # Fold 1/(H*W) into the weight (bias unscaled); zero-pad OUT_DIM -> 128 lanes.
    inv_hw = 1.0 / float(HW)
    w_pad = jnp.zeros((3 * BINS, OUT_PAD), jnp.float32)
    w_pad = w_pad.at[:, :OUT_DIM].set(w_t.astype(jnp.float32) * inv_hw)
    b_pad = jnp.zeros((1, OUT_PAD), jnp.float32)
    b_pad = b_pad.at[0, :OUT_DIM].set(b.astype(jnp.float32))

    kernel = functools.partial(_hist_fc_kernel, sub_hw=sub_hw, tile_hw=tile_hw,
                               bt=bt, G=G, needs_mask=needs_mask)

    out = pl.pallas_call(
        kernel,
        out_shape=jax.ShapeDtypeStruct((nb, bt, OUT_PAD), jnp.float32),
        grid=(nb, nk),
        in_specs=[
            pl.BlockSpec((1, rows, tile_hw), lambda i, k: (i, 0, k)),
            pl.BlockSpec((3 * BINS, OUT_PAD), lambda i, k: (0, 0)),
            pl.BlockSpec((1, OUT_PAD), lambda i, k: (0, 0)),
        ],
        out_specs=pl.BlockSpec((1, bt, OUT_PAD), lambda i, k: (i, 0, 0)),
        scratch_shapes=[pltpu.VMEM((rows, BINS), jnp.float32)],
        compiler_params=pltpu.CompilerParams(
            dimension_semantics=("parallel", "arbitrary")),
    )(x3, w_pad, b_pad)

    return out.reshape(B, OUT_PAD)[:, :OUT_DIM]


def reference(x, w_t, b):
    """Pure-JAX reference mirroring the PyTorch forward (eval mode)."""
    B = x.shape[0]
    xf = x.reshape(B, 3, -1).astype(jnp.float32)
    edges = [i / float(BINS) for i in range(BINS + 1)]
    feats = []
    for c in range(3):
        xc = xf[:, c, :]
        cols = []
        for i in range(BINS):
            mask = (xc >= edges[i]) & (xc < edges[i + 1])
            if i == BINS - 1:
                mask = mask | (xc == edges[i + 1])
            cols.append(jnp.mean(mask.astype(jnp.float32), axis=1))
        feats.append(jnp.stack(cols, axis=1))
    hist = jnp.concatenate(feats, axis=1)
    return jnp.maximum(hist @ w_t + b, 0.0)


if __name__ == "__main__":
    key = jax.random.PRNGKey(0)
    kx, kw, kb, kx2 = jax.random.split(key, 4)

    # Deterministic nn.Linear(48, 64)-shaped params.
    fan_in = 3 * BINS
    bound = 1.0 / (fan_in ** 0.5)
    w = jax.random.uniform(kw, (OUT_DIM, fan_in), minval=-bound, maxval=bound,
                           dtype=jnp.float32)
    b = jax.random.uniform(kb, (OUT_DIM,), minval=-bound, maxval=bound,
                           dtype=jnp.float32)
    w_t = w.T                                        # (48, 64)

    # Case 1: small image with edge / out-of-range values (x==1, x>1, x<0).
    B, C, H, W = 2, 3, 16, 16
    x = jax.random.uniform(kx, (B, C, H, W), dtype=jnp.float32)
    x = x.at[0, 0, 0, 0].set(1.0)      # == upper edge -> last bin
    x = x.at[0, 1, 0, 1].set(1.5)      # > 1 -> no bin
    x = x.at[1, 2, 3, 4].set(-0.25)    # < 0 -> no bin

    out = jax.block_until_ready(color_histogram_layer(x, w_t, b))
    ref = reference(x, w_t, b)
    assert out.shape == (B, OUT_DIM)
    assert jnp.allclose(out, ref, atol=2e-5, rtol=2e-5), "mismatch vs reference (16x16)"

    # Case 2: non-power-of-two pixel count -> exercises the G-fold path.
    xb = jax.random.uniform(kx2, (2, 3, 40, 40), dtype=jnp.float32)
    out2 = jax.block_until_ready(color_histogram_layer(xb, w_t, b))
    ref2 = reference(xb, w_t, b)
    assert jnp.allclose(out2, ref2, atol=2e-5, rtol=2e-5), "mismatch vs reference (40x40)"

    print("KERNEL_OK")
</pallas_src>

<mosaic_0001>
module attributes {stable_mosaic.version = 11 : i64} {
  func.func @_hist_fc_kernel(%arg0: i32, %arg1: i32, %arg2: memref<1x6x128xf32, #tpu.memory_space<vmem>>, %arg3: memref<48x128xf32, #tpu.memory_space<vmem>>, %arg4: memref<1x128xf32, #tpu.memory_space<vmem>>, %arg5: memref<1x1x128xf32, #tpu.memory_space<vmem>>, %arg6: memref<6x16xf32, #tpu.memory_space<vmem>>) attributes {dimension_semantics = [#tpu.dimension_semantics<parallel>, #tpu.dimension_semantics<arbitrary>], iteration_bounds = array<i64: 2, 1>, scalar_prefetch = 0 : i64, scratch_operands = 1 : i64, tpu.core_type = #tpu.core_type<tc>, window_params = [{transform_indices = @transform_0, window_bounds = array<i64: 1, 6, 128>}, {pipeline_mode = #tpu.pipeline_mode<synchronous>, transform_indices = @transform_1, window_bounds = array<i64: 48, 128>}, {pipeline_mode = #tpu.pipeline_mode<synchronous>, transform_indices = @transform_2, window_bounds = array<i64: 1, 128>}, {transform_indices = @transform_3, window_bounds = array<i64: 1, 1, 128>}]} {
    %c0_i32 = arith.constant 0 : i32
    %0 = arith.cmpi eq, %arg1, %c0_i32 : i32
    %1 = arith.extui %0 : i1 to i32
    %c0_i32_0 = arith.constant 0 : i32
    %2 = arith.cmpi ne, %1, %c0_i32_0 : i32
    scf.if %2 {
      %cst_45 = arith.constant 0.000000e+00 : f32
      %104 = vector.broadcast %cst_45 : f32 to vector<6x16xf32>
      %c0_46 = arith.constant 0 : index
      %c0_47 = arith.constant 0 : index
      %105 = vector.load %arg6[%c0_46, %c0_47] : memref<6x16xf32, #tpu.memory_space<vmem>>, vector<6x16xf32>
      tpu.vector_store %arg6[%c0_46, %c0_47], %104 {strides = array<i32>} : memref<6x16xf32, #tpu.memory_space<vmem>>, vector<6x16xf32>,
    } else {
    }
    %c0_i32_1 = arith.constant 0 : i32
    %3 = vector.broadcast %c0_i32_1 : i32 to vector<6x16xi32>
    %c0 = arith.constant 0 : index
    %c0_2 = arith.constant 0 : index
    %c0_3 = arith.constant 0 : index
    %4 = vector.load %arg2[%c0, %c0_2, %c0_3] : memref<1x6x128xf32, #tpu.memory_space<vmem>>, vector<1x6x128xf32>
    %5 = vector.shape_cast %4 : vector<1x6x128xf32> to vector<6x128xf32>
    %cst = arith.constant 1.600000e+01 : f32
    %6 = vector.broadcast %cst : f32 to vector<6x128xf32>
    %7 = arith.mulf %5, %6 : vector<6x128xf32>
    %8 = math.floor %7 : vector<6x128xf32>
    %cst_4 = arith.constant 1.500000e+01 : f32
    %9 = vector.broadcast %cst_4 : f32 to vector<6x128xf32>
    %10 = arith.minimumf %8, %9 : vector<6x128xf32>
    %cst_5 = arith.constant 1.000000e+00 : f32
    %11 = vector.broadcast %cst_5 : f32 to vector<6x128xf32>
    %12 = arith.cmpf ogt, %5, %11 : vector<6x128xf32>
    %cst_6 = arith.constant -1.000000e+00 : f32
    %13 = vector.broadcast %cst_6 : f32 to vector<6x128xf32>
    %14 = arith.select %12, %13, %10 : vector<6x128xi1>, vector<6x128xf32>
    %cst_7 = arith.constant 0.000000e+00 : f32
    %15 = vector.broadcast %cst_7 : f32 to vector<6x128xf32>
    %16 = arith.cmpf oeq, %14, %15 : vector<6x128xf32>
    %17 = arith.extui %16 : vector<6x128xi1> to vector<6x128xi32>
    %cst_8 = arith.constant dense<0> : vector<6xi32>
    %18 = vector.multi_reduction <add>, %17, %cst_8 [1] : vector<6x128xi32> to vector<6xi32>
    %19 = vector.shape_cast %18 : vector<6xi32> to vector<6x1xi32>
    %cst_9 = arith.constant 1.000000e+00 : f32
    %20 = vector.broadcast %cst_9 : f32 to vector<6x128xf32>
    %21 = arith.cmpf oeq, %14, %20 : vector<6x128xf32>
    %22 = arith.extui %21 : vector<6x128xi1> to vector<6x128xi32>
    %cst_10 = arith.constant dense<0> : vector<6xi32>
    %23 = vector.multi_reduction <add>, %22, %cst_10 [1] : vector<6x128xi32> to vector<6xi32>
    %24 = vector.shape_cast %23 : vector<6xi32> to vector<6x1xi32>
    %cst_11 = arith.constant 2.000000e+00 : f32
    %25 = vector.broadcast %cst_11 : f32 to vector<6x128xf32>
    %26 = arith.cmpf oeq, %14, %25 : vector<6x128xf32>
    %27 = arith.extui %26 : vector<6x128xi1> to vector<6x128xi32>
    %cst_12 = arith.constant dense<0> : vector<6xi32>
    %28 = vector.multi_reduction <add>, %27, %cst_12 [1] : vector<6x128xi32> to vector<6xi32>
    %29 = vector.shape_cast %28 : vector<6xi32> to vector<6x1xi32>
    %cst_13 = arith.constant 3.000000e+00 : f32
    %30 = vector.broadcast %cst_13 : f32 to vector<6x128xf32>
    %31 = arith.cmpf oeq, %14, %30 : vector<6x128xf32>
    %32 = arith.extui %31 : vector<6x128xi1> to vector<6x128xi32>
    %cst_14 = arith.constant dense<0> : vector<6xi32>
    %33 = vector.multi_reduction <add>, %32, %cst_14 [1] : vector<6x128xi32> to vector<6xi32>
    %34 = vector.shape_cast %33 : vector<6xi32> to vector<6x1xi32>
    %cst_15 = arith.constant 4.000000e+00 : f32
    %35 = vector.broadcast %cst_15 : f32 to vector<6x128xf32>
    %36 = arith.cmpf oeq, %14, %35 : vector<6x128xf32>
    %37 = arith.extui %36 : vector<6x128xi1> to vector<6x128xi32>
    %cst_16 = arith.constant dense<0> : vector<6xi32>
    %38 = vector.multi_reduction <add>, %37, %cst_16 [1] : vector<6x128xi32> to vector<6xi32>
    %39 = vector.shape_cast %38 : vector<6xi32> to vector<6x1xi32>
    %cst_17 = arith.constant 5.000000e+00 : f32
    %40 = vector.broadcast %cst_17 : f32 to vector<6x128xf32>
    %41 = arith.cmpf oeq, %14, %40 : vector<6x128xf32>
    %42 = arith.extui %41 : vector<6x128xi1> to vector<6x128xi32>
    %cst_18 = arith.constant dense<0> : vector<6xi32>
    %43 = vector.multi_reduction <add>, %42, %cst_18 [1] : vector<6x128xi32> to vector<6xi32>
    %44 = vector.shape_cast %43 : vector<6xi32> to vector<6x1xi32>
    %cst_19 = arith.constant 6.000000e+00 : f32
    %45 = vector.broadcast %cst_19 : f32 to vector<6x128xf32>
    %46 = arith.cmpf oeq, %14, %45 : vector<6x128xf32>
    %47 = arith.extui %46 : vector<6x128xi1> to vector<6x128xi32>
    %cst_20 = arith.constant dense<0> : vector<6xi32>
    %48 = vector.multi_reduction <add>, %47, %cst_20 [1] : vector<6x128xi32> to vector<6xi32>
    %49 = vector.shape_cast %48 : vector<6xi32> to vector<6x1xi32>
    %cst_21 = arith.constant 7.000000e+00 : f32
    %50 = vector.broadcast %cst_21 : f32 to vector<6x128xf32>
    %51 = arith.cmpf oeq, %14, %50 : vector<6x128xf32>
    %52 = arith.extui %51 : vector<6x128xi1> to vector<6x128xi32>
    %cst_22 = arith.constant dense<0> : vector<6xi32>
    %53 = vector.multi_reduction <add>, %52, %cst_22 [1] : vector<6x128xi32> to vector<6xi32>
    %54 = vector.shape_cast %53 : vector<6xi32> to vector<6x1xi32>
    %cst_23 = arith.constant 8.000000e+00 : f32
    %55 = vector.broadcast %cst_23 : f32 to vector<6x128xf32>
    %56 = arith.cmpf oeq, %14, %55 : vector<6x128xf32>
    %57 = arith.extui %56 : vector<6x128xi1> to vector<6x128xi32>
    %cst_24 = arith.constant dense<0> : vector<6xi32>
    %58 = vector.multi_reduction <add>, %57, %cst_24 [1] : vector<6x128xi32> to vector<6xi32>
    %59 = vector.shape_cast %58 : vector<6xi32> to vector<6x1xi32>
    %cst_25 = arith.constant 9.000000e+00 : f32
    %60 = vector.broadcast %cst_25 : f32 to vector<6x128xf32>
    %61 = arith.cmpf oeq, %14, %60 : vector<6x128xf32>
    %62 = arith.extui %61 : vector<6x128xi1> to vector<6x128xi32>
    %cst_26 = arith.constant dense<0> : vector<6xi32>
    %63 = vector.multi_reduction <add>, %62, %cst_26 [1] : vector<6x128xi32> to vector<6xi32>
    %64 = vector.shape_cast %63 : vector<6xi32> to vector<6x1xi32>
    %cst_27 = arith.constant 1.000000e+01 : f32
    %65 = vector.broadcast %cst_27 : f32 to vector<6x128xf32>
    %66 = arith.cmpf oeq, %14, %65 : vector<6x128xf32>
    %67 = arith.extui %66 : vector<6x128xi1> to vector<6x128xi32>
    %cst_28 = arith.constant dense<0> : vector<6xi32>
    %68 = vector.multi_reduction <add>, %67, %cst_28 [1] : vector<6x128xi32> to vector<6xi32>
    %69 = vector.shape_cast %68 : vector<6xi32> to vector<6x1xi32>
    %cst_29 = arith.constant 1.100000e+01 : f32
    %70 = vector.broadcast %cst_29 : f32 to vector<6x128xf32>
    %71 = arith.cmpf oeq, %14, %70 : vector<6x128xf32>
    %72 = arith.extui %71 : vector<6x128xi1> to vector<6x128xi32>
    %cst_30 = arith.constant dense<0> : vector<6xi32>
    %73 = vector.multi_reduction <add>, %72, %cst_30 [1] : vector<6x128xi32> to vector<6xi32>
    %74 = vector.shape_cast %73 : vector<6xi32> to vector<6x1xi32>
    %cst_31 = arith.constant 1.200000e+01 : f32
    %75 = vector.broadcast %cst_31 : f32 to vector<6x128xf32>
    %76 = arith.cmpf oeq, %14, %75 : vector<6x128xf32>
    %77 = arith.extui %76 : vector<6x128xi1> to vector<6x128xi32>
    %cst_32 = arith.constant dense<0> : vector<6xi32>
    %78 = vector.multi_reduction <add>, %77, %cst_32 [1] : vector<6x128xi32> to vector<6xi32>
    %79 = vector.shape_cast %78 : vector<6xi32> to vector<6x1xi32>
    %cst_33 = arith.constant 1.300000e+01 : f32
    %80 = vector.broadcast %cst_33 : f32 to vector<6x128xf32>
    %81 = arith.cmpf oeq, %14, %80 : vector<6x128xf32>
    %82 = arith.extui %81 : vector<6x128xi1> to vector<6x128xi32>
    %cst_34 = arith.constant dense<0> : vector<6xi32>
    %83 = vector.multi_reduction <add>, %82, %cst_34 [1] : vector<6x128xi32> to vector<6xi32>
    %84 = vector.shape_cast %83 : vector<6xi32> to vector<6x1xi32>
    %cst_35 = arith.constant 1.400000e+01 : f32
    %85 = vector.broadcast %cst_35 : f32 to vector<6x128xf32>
    %86 = arith.cmpf oeq, %14, %85 : vector<6x128xf32>
    %87 = arith.extui %86 : vector<6x128xi1> to vector<6x128xi32>
    %cst_36 = arith.constant dense<0> : vector<6xi32>
    %88 = vector.multi_reduction <add>, %87, %cst_36 [1] : vector<6x128xi32> to vector<6xi32>
    %89 = vector.shape_cast %88 : vector<6xi32> to vector<6x1xi32>
    %cst_37 = arith.constant 1.500000e+01 : f32
    %90 = vector.broadcast %cst_37 : f32 to vector<6x128xf32>
    %91 = arith.cmpf oeq, %14, %90 : vector<6x128xf32>
    %92 = arith.extui %91 : vector<6x128xi1> to vector<6x128xi32>
    %cst_38 = arith.constant dense<0> : vector<6xi32>
    %93 = vector.multi_reduction <add>, %92, %cst_38 [1] : vector<6x128xi32> to vector<6xi32>
    %94 = vector.shape_cast %93 : vector<6xi32> to vector<6x1xi32>
    %95 = tpu.concatenate %19, %24, %29, %34, %39, %44, %49, %54, %59, %64, %69, %74, %79, %84, %89, %94 in 1 : vector<6x1xi32>, vector<6x1xi32>, vector<6x1xi32>, vector<6x1xi32>, vector<6x1xi32>, vector<6x1xi32>, vector<6x1xi32>, vector<6x1xi32>, vector<6x1xi32>, vector<6x1xi32>, vector<6x1xi32>, vector<6x1xi32>, vector<6x1xi32>, vector<6x1xi32>, vector<6x1xi32>, vector<6x1xi32> -> vector<6x16xi32>
    %96 = arith.addi %3, %95 : vector<6x16xi32>
    %c0_39 = arith.constant 0 : index
    %c0_40 = arith.constant 0 : index
    %97 = vector.load %arg6[%c0_39, %c0_40] : memref<6x16xf32, #tpu.memory_space<vmem>>, vector<6x16xf32>
    %98 = arith.sitofp %96 : vector<6x16xi32> to vector<6x16xf32>
    %99 = arith.addf %97, %98 : vector<6x16xf32>
    %c0_41 = arith.constant 0 : index
    %c0_42 = arith.constant 0 : index
    %100 = vector.load %arg6[%c0_41, %c0_42] : memref<6x16xf32, #tpu.memory_space<vmem>>, vector<6x16xf32>
    tpu.vector_store %arg6[%c0_41, %c0_42], %99 {strides = array<i32>} : memref<6x16xf32, #tpu.memory_space<vmem>>, vector<6x16xf32>,
    %c0_i32_43 = arith.constant 0 : i32
    %101 = arith.cmpi eq, %arg1, %c0_i32_43 : i32
    %102 = arith.extui %101 : i1 to i32
    %c0_i32_44 = arith.constant 0 : i32
    %103 = arith.cmpi ne, %102, %c0_i32_44 : i32
    scf.if %103 {
      %c0_45 = arith.constant 0 : index
      %c0_46 = arith.constant 0 : index
      %104 = vector.load %arg6[%c0_45, %c0_46] : memref<6x16xf32, #tpu.memory_space<vmem>>, vector<6x16xf32>
      %105 = vector.extract_strided_slice %104 {offsets = [0, 0], sizes = [2, 16], strides = [1, 1]} : vector<6x16xf32> to vector<2x16xf32>
      %cst_47 = arith.constant dense<0.000000e+00> : vector<16xf32>
      %106 = vector.multi_reduction <add>, %105, %cst_47 [0] : vector<2x16xf32> to vector<16xf32>
      %107 = vector.shape_cast %106 : vector<16xf32> to vector<1x16xf32>
      %108 = vector.extract_strided_slice %104 {offsets = [2, 0], sizes = [2, 16], strides = [1, 1]} : vector<6x16xf32> to vector<2x16xf32>
      %cst_48 = arith.constant dense<0.000000e+00> : vector<16xf32>
      %109 = vector.multi_reduction <add>, %108, %cst_48 [0] : vector<2x16xf32> to vector<16xf32>
      %110 = vector.shape_cast %109 : vector<16xf32> to vector<1x16xf32>
      %111 = vector.extract_strided_slice %104 {offsets = [4, 0], sizes = [2, 16], strides = [1, 1]} : vector<6x16xf32> to vector<2x16xf32>
      %cst_49 = arith.constant dense<0.000000e+00> : vector<16xf32>
      %112 = vector.multi_reduction <add>, %111, %cst_49 [0] : vector<2x16xf32> to vector<16xf32>
      %113 = vector.shape_cast %112 : vector<16xf32> to vector<1x16xf32>
      %114 = tpu.concatenate %107, %110, %113 in 1 : vector<1x16xf32>, vector<1x16xf32>, vector<1x16xf32> -> vector<1x48xf32>
      %c0_50 = arith.constant 0 : index
      %c0_51 = arith.constant 0 : index
      %115 = vector.load %arg3[%c0_50, %c0_51] : memref<48x128xf32, #tpu.memory_space<vmem>>, vector<48x128xf32>
      %cst_52 = arith.constant 0.000000e+00 : f32
      %116 = vector.broadcast %cst_52 : f32 to vector<1x128xf32>
      %c0_53 = arith.constant 0 : index
      %c0_54 = arith.constant 0 : index
      %117 = vector.load %arg4[%c0_53, %c0_54] : memref<1x128xf32, #tpu.memory_space<vmem>>, vector<1x128xf32>
      %118 = arith.addf %116, %117 : vector<1x128xf32>
      %119 = vector.extract_strided_slice %114 {offsets = [0, 0], sizes = [1, 1], strides = [1, 1]} : vector<1x48xf32> to vector<1x1xf32>
      %120 = vector.extract_strided_slice %115 {offsets = [0, 0], sizes = [1, 128], strides = [1, 1]} : vector<48x128xf32> to vector<1x128xf32>
      %121 = vector.broadcast %119 : vector<1x1xf32> to vector<1x128xf32>
      %122 = arith.mulf %121, %120 : vector<1x128xf32>
      %123 = arith.addf %118, %122 : vector<1x128xf32>
      %124 = vector.extract_strided_slice %114 {offsets = [0, 1], sizes = [1, 1], strides = [1, 1]} : vector<1x48xf32> to vector<1x1xf32>
      %125 = vector.extract_strided_slice %115 {offsets = [1, 0], sizes = [1, 128], strides = [1, 1]} : vector<48x128xf32> to vector<1x128xf32>
      %126 = vector.broadcast %124 : vector<1x1xf32> to vector<1x128xf32>
      %127 = arith.mulf %126, %125 : vector<1x128xf32>
      %128 = arith.addf %123, %127 : vector<1x128xf32>
      %129 = vector.extract_strided_slice %114 {offsets = [0, 2], sizes = [1, 1], strides = [1, 1]} : vector<1x48xf32> to vector<1x1xf32>
      %130 = vector.extract_strided_slice %115 {offsets = [2, 0], sizes = [1, 128], strides = [1, 1]} : vector<48x128xf32> to vector<1x128xf32>
      %131 = vector.broadcast %129 : vector<1x1xf32> to vector<1x128xf32>
      %132 = arith.mulf %131, %130 : vector<1x128xf32>
      %133 = arith.addf %128, %132 : vector<1x128xf32>
      %134 = vector.extract_strided_slice %114 {offsets = [0, 3], sizes = [1, 1], strides = [1, 1]} : vector<1x48xf32> to vector<1x1xf32>
      %135 = vector.extract_strided_slice %115 {offsets = [3, 0], sizes = [1, 128], strides = [1, 1]} : vector<48x128xf32> to vector<1x128xf32>
      %136 = vector.broadcast %134 : vector<1x1xf32> to vector<1x128xf32>
      %137 = arith.mulf %136, %135 : vector<1x128xf32>
      %138 = arith.addf %133, %137 : vector<1x128xf32>
      %139 = vector.extract_strided_slice %114 {offsets = [0, 4], sizes = [1, 1], strides = [1, 1]} : vector<1x48xf32> to vector<1x1xf32>
      %140 = vector.extract_strided_slice %115 {offsets = [4, 0], sizes = [1, 128], strides = [1, 1]} : vector<48x128xf32> to vector<1x128xf32>
      %141 = vector.broadcast %139 : vector<1x1xf32> to vector<1x128xf32>
      %142 = arith.mulf %141, %140 : vector<1x128xf32>
      %143 = arith.addf %138, %142 : vector<1x128xf32>
      %144 = vector.extract_strided_slice %114 {offsets = [0, 5], sizes = [1, 1], strides = [1, 1]} : vector<1x48xf32> to vector<1x1xf32>
      %145 = vector.extract_strided_slice %115 {offsets = [5, 0], sizes = [1, 128], strides = [1, 1]} : vector<48x128xf32> to vector<1x128xf32>
      %146 = vector.broadcast %144 : vector<1x1xf32> to vector<1x128xf32>
      %147 = arith.mulf %146, %145 : vector<1x128xf32>
      %148 = arith.addf %143, %147 : vector<1x128xf32>
      %149 = vector.extract_strided_slice %114 {offsets = [0, 6], sizes = [1, 1], strides = [1, 1]} : vector<1x48xf32> to vector<1x1xf32>
      %150 = vector.extract_strided_slice %115 {offsets = [6, 0], sizes = [1, 128], strides = [1, 1]} : vector<48x128xf32> to vector<1x128xf32>
      %151 = vector.broadcast %149 : vector<1x1xf32> to vector<1x128xf32>
      %152 = arith.mulf %151, %150 : vector<1x128xf32>
      %153 = arith.addf %148, %152 : vector<1x128xf32>
      %154 = vector.extract_strided_slice %114 {offsets = [0, 7], sizes = [1, 1], strides = [1, 1]} : vector<1x48xf32> to vector<1x1xf32>
      %155 = vector.extract_strided_slice %115 {offsets = [7, 0], sizes = [1, 128], strides = [1, 1]} : vector<48x128xf32> to vector<1x128xf32>
      %156 = vector.broadcast %154 : vector<1x1xf32> to vector<1x128xf32>
      %157 = arith.mulf %156, %155 : vector<1x128xf32>
      %158 = arith.addf %153, %157 : vector<1x128xf32>
      %159 = vector.extract_strided_slice %114 {offsets = [0, 8], sizes = [1, 1], strides = [1, 1]} : vector<1x48xf32> to vector<1x1xf32>
      %160 = vector.extract_strided_slice %115 {offsets = [8, 0], sizes = [1, 128], strides = [1, 1]} : vector<48x128xf32> to vector<1x128xf32>
      %161 = vector.broadcast %159 : vector<1x1xf32> to vector<1x128xf32>
      %162 = arith.mulf %161, %160 : vector<1x128xf32>
      %163 = arith.addf %158, %162 : vector<1x128xf32>
      %164 = vector.extract_strided_slice %114 {offsets = [0, 9], sizes = [1, 1], strides = [1, 1]} : vector<1x48xf32> to vector<1x1xf32>
      %165 = vector.extract_strided_slice %115 {offsets = [9, 0], sizes = [1, 128], strides = [1, 1]} : vector<48x128xf32> to vector<1x128xf32>
      %166 = vector.broadcast %164 : vector<1x1xf32> to vector<1x128xf32>
      %167 = arith.mulf %166, %165 : vector<1x128xf32>
      %168 = arith.addf %163, %167 : vector<1x128xf32>
      %169 = vector.extract_strided_slice %114 {offsets = [0, 10], sizes = [1, 1], strides = [1, 1]} : vector<1x48xf32> to vector<1x1xf32>
      %170 = vector.extract_strided_slice %115 {offsets = [10, 0], sizes = [1, 128], strides = [1, 1]} : vector<48x128xf32> to vector<1x128xf32>
      %171 = vector.broadcast %169 : vector<1x1xf32> to vector<1x128xf32>
      %172 = arith.mulf %171, %170 : vector<1x128xf32>
      %173 = arith.addf %168, %172 : vector<1x128xf32>
      %174 = vector.extract_strided_slice %114 {offsets = [0, 11], sizes = [1, 1], strides = [1, 1]} : vector<1x48xf32> to vector<1x1xf32>
      %175 = vector.extract_strided_slice %115 {offsets = [11, 0], sizes = [1, 128], strides = [1, 1]} : vector<48x128xf32> to vector<1x128xf32>
      %176 = vector.broadcast %174 : vector<1x1xf32> to vector<1x128xf32>
      %177 = arith.mulf %176, %175 : vector<1x128xf32>
      %178 = arith.addf %173, %177 : vector<1x128xf32>
      %179 = vector.extract_strided_slice %114 {offsets = [0, 12], sizes = [1, 1], strides = [1, 1]} : vector<1x48xf32> to vector<1x1xf32>
      %180 = vector.extract_strided_slice %115 {offsets = [12, 0], sizes = [1, 128], strides = [1, 1]} : vector<48x128xf32> to vector<1x128xf32>
      %181 = vector.broadcast %179 : vector<1x1xf32> to vector<1x128xf32>
      %182 = arith.mulf %181, %180 : vector<1x128xf32>
      %183 = arith.addf %178, %182 : vector<1x128xf32>
      %184 = vector.extract_strided_slice %114 {offsets = [0, 13], sizes = [1, 1], strides = [1, 1]} : vector<1x48xf32> to vector<1x1xf32>
      %185 = vector.extract_strided_slice %115 {offsets = [13, 0], sizes = [1, 128], strides = [1, 1]} : vector<48x128xf32> to vector<1x128xf32>
      %186 = vector.broadcast %184 : vector<1x1xf32> to vector<1x128xf32>
      %187 = arith.mulf %186, %185 : vector<1x128xf32>
      %188 = arith.addf %183, %187 : vector<1x128xf32>
      %189 = vector.extract_strided_slice %114 {offsets = [0, 14], sizes = [1, 1], strides = [1, 1]} : vector<1x48xf32> to vector<1x1xf32>
      %190 = vector.extract_strided_slice %115 {offsets = [14, 0], sizes = [1, 128], strides = [1, 1]} : vector<48x128xf32> to vector<1x128xf32>
      %191 = vector.broadcast %189 : vector<1x1xf32> to vector<1x128xf32>
      %192 = arith.mulf %191, %190 : vector<1x128xf32>
      %193 = arith.addf %188, %192 : vector<1x128xf32>
      %194 = vector.extract_strided_slice %114 {offsets = [0, 15], sizes = [1, 1], strides = [1, 1]} : vector<1x48xf32> to vector<1x1xf32>
      %195 = vector.extract_strided_slice %115 {offsets = [15, 0], sizes = [1, 128], strides = [1, 1]} : vector<48x128xf32> to vector<1x128xf32>
      %196 = vector.broadcast %194 : vector<1x1xf32> to vector<1x128xf32>
      %197 = arith.mulf %196, %195 : vector<1x128xf32>
      %198 = arith.addf %193, %197 : vector<1x128xf32>
      %199 = vector.extract_strided_slice %114 {offsets = [0, 16], sizes = [1, 1], strides = [1, 1]} : vector<1x48xf32> to vector<1x1xf32>
      %200 = vector.extract_strided_slice %115 {offsets = [16, 0], sizes = [1, 128], strides = [1, 1]} : vector<48x128xf32> to vector<1x128xf32>
      %201 = vector.broadcast %199 : vector<1x1xf32> to vector<1x128xf32>
      %202 = arith.mulf %201, %200 : vector<1x128xf32>
      %203 = arith.addf %198, %202 : vector<1x128xf32>
      %204 = vector.extract_strided_slice %114 {offsets = [0, 17], sizes = [1, 1], strides = [1, 1]} : vector<1x48xf32> to vector<1x1xf32>
      %205 = vector.extract_strided_slice %115 {offsets = [17, 0], sizes = [1, 128], strides = [1, 1]} : vector<48x128xf32> to vector<1x128xf32>
      %206 = vector.broadcast %204 : vector<1x1xf32> to vector<1x128xf32>
      %207 = arith.mulf %206, %205 : vector<1x128xf32>
      %208 = arith.addf %203, %207 : vector<1x128xf32>
      %209 = vector.extract_strided_slice %114 {offsets = [0, 18], sizes = [1, 1], strides = [1, 1]} : vector<1x48xf32> to vector<1x1xf32>
      %210 = vector.extract_strided_slice %115 {offsets = [18, 0], sizes = [1, 128], strides = [1, 1]} : vector<48x128xf32> to vector<1x128xf32>
      %211 = vector.broadcast %209 : vector<1x1xf32> to vector<1x128xf32>
      %212 = arith.mulf %211, %210 : vector<1x128xf32>
      %213 = arith.addf %208, %212 : vector<1x128xf32>
      %214 = vector.extract_strided_slice %114 {offsets = [0, 19], sizes = [1, 1], strides = [1, 1]} : vector<1x48xf32> to vector<1x1xf32>
      %215 = vector.extract_strided_slice %115 {offsets = [19, 0], sizes = [1, 128], strides = [1, 1]} : vector<48x128xf32> to vector<1x128xf32>
      %216 = vector.broadcast %214 : vector<1x1xf32> to vector<1x128xf32>
      %217 = arith.mulf %216, %215 : vector<1x128xf32>
      %218 = arith.addf %213, %217 : vector<1x128xf32>
      %219 = vector.extract_strided_slice %114 {offsets = [0, 20], sizes = [1, 1], strides = [1, 1]} : vector<1x48xf32> to vector<1x1xf32>
      %220 = vector.extract_strided_slice %115 {offsets = [20, 0], sizes = [1, 128], strides = [1, 1]} : vector<48x128xf32> to vector<1x128xf32>
      %221 = vector.broadcast %219 : vector<1x1xf32> to vector<1x128xf32>
      %222 = arith.mulf %221, %220 : vector<1x128xf32>
      %223 = arith.addf %218, %222 : vector<1x128xf32>
      %224 = vector.extract_strided_slice %114 {offsets = [0, 21], sizes = [1, 1], strides = [1, 1]} : vector<1x48xf32> to vector<1x1xf32>
      %225 = vector.extract_strided_slice %115 {offsets = [21, 0], sizes = [1, 128], strides = [1, 1]} : vector<48x128xf32> to vector<1x128xf32>
      %226 = vector.broadcast %224 : vector<1x1xf32> to vector<1x128xf32>
      %227 = arith.mulf %226, %225 : vector<1x128xf32>
      %228 = arith.addf %223, %227 : vector<1x128xf32>
      %229 = vector.extract_strided_slice %114 {offsets = [0, 22], sizes = [1, 1], strides = [1, 1]} : vector<1x48xf32> to vector<1x1xf32>
      %230 = vector.extract_strided_slice %115 {offsets = [22, 0], sizes = [1, 128], strides = [1, 1]} : vector<48x128xf32> to vector<1x128xf32>
      %231 = vector.broadcast %229 : vector<1x1xf32> to vector<1x128xf32>
      %232 = arith.mulf %231, %230 : vector<1x128xf32>
      %233 = arith.addf %228, %232 : vector<1x128xf32>
      %234 = vector.extract_strided_slice %114 {offsets = [0, 23], sizes = [1, 1], strides = [1, 1]} : vector<1x48xf32> to vector<1x1xf32>
      %235 = vector.extract_strided_slice %115 {offsets = [23, 0], sizes = [1, 128], strides = [1, 1]} : vector<48x128xf32> to vector<1x128xf32>
      %236 = vector.broadcast %234 : vector<1x1xf32> to vector<1x128xf32>
      %237 = arith.mulf %236, %235 : vector<1x128xf32>
      %238 = arith.addf %233, %237 : vector<1x128xf32>
      %239 = vector.extract_strided_slice %114 {offsets = [0, 24], sizes = [1, 1], strides = [1, 1]} : vector<1x48xf32> to vector<1x1xf32>
      %240 = vector.extract_strided_slice %115 {offsets = [24, 0], sizes = [1, 128], strides = [1, 1]} : vector<48x128xf32> to vector<1x128xf32>
      %241 = vector.broadcast %239 : vector<1x1xf32> to vector<1x128xf32>
      %242 = arith.mulf %241, %240 : vector<1x128xf32>
      %243 = arith.addf %238, %242 : vector<1x128xf32>
      %244 = vector.extract_strided_slice %114 {offsets = [0, 25], sizes = [1, 1], strides = [1, 1]} : vector<1x48xf32> to vector<1x1xf32>
      %245 = vector.extract_strided_slice %115 {offsets = [25, 0], sizes = [1, 128], strides = [1, 1]} : vector<48x128xf32> to vector<1x128xf32>
      %246 = vector.broadcast %244 : vector<1x1xf32> to vector<1x128xf32>
      %247 = arith.mulf %246, %245 : vector<1x128xf32>
      %248 = arith.addf %243, %247 : vector<1x128xf32>
      %249 = vector.extract_strided_slice %114 {offsets = [0, 26], sizes = [1, 1], strides = [1, 1]} : vector<1x48xf32> to vector<1x1xf32>
      %250 = vector.extract_strided_slice %115 {offsets = [26, 0], sizes = [1, 128], strides = [1, 1]} : vector<48x128xf32> to vector<1x128xf32>
      %251 = vector.broadcast %249 : vector<1x1xf32> to vector<1x128xf32>
      %252 = arith.mulf %251, %250 : vector<1x128xf32>
      %253 = arith.addf %248, %252 : vector<1x128xf32>
      %254 = vector.extract_strided_slice %114 {offsets = [0, 27], sizes = [1, 1], strides = [1, 1]} : vector<1x48xf32> to vector<1x1xf32>
      %255 = vector.extract_strided_slice %115 {offsets = [27, 0], sizes = [1, 128], strides = [1, 1]} : vector<48x128xf32> to vector<1x128xf32>
      %256 = vector.broadcast %254 : vector<1x1xf32> to vector<1x128xf32>
      %257 = arith.mulf %256, %255 : vector<1x128xf32>
      %258 = arith.addf %253, %257 : vector<1x128xf32>
      %259 = vector.extract_strided_slice %114 {offsets = [0, 28], sizes = [1, 1], strides = [1, 1]} : vector<1x48xf32> to vector<1x1xf32>
      %260 = vector.extract_strided_slice %115 {offsets = [28, 0], sizes = [1, 128], strides = [1, 1]} : vector<48x128xf32> to vector<1x128xf32>
      %261 = vector.broadcast %259 : vector<1x1xf32> to vector<1x128xf32>
      %262 = arith.mulf %261, %260 : vector<1x128xf32>
      %263 = arith.addf %258, %262 : vector<1x128xf32>
      %264 = vector.extract_strided_slice %114 {offsets = [0, 29], sizes = [1, 1], strides = [1, 1]} : vector<1x48xf32> to vector<1x1xf32>
      %265 = vector.extract_strided_slice %115 {offsets = [29, 0], sizes = [1, 128], strides = [1, 1]} : vector<48x128xf32> to vector<1x128xf32>
      %266 = vector.broadcast %264 : vector<1x1xf32> to vector<1x128xf32>
      %267 = arith.mulf %266, %265 : vector<1x128xf32>
      %268 = arith.addf %263, %267 : vector<1x128xf32>
      %269 = vector.extract_strided_slice %114 {offsets = [0, 30], sizes = [1, 1], strides = [1, 1]} : vector<1x48xf32> to vector<1x1xf32>
      %270 = vector.extract_strided_slice %115 {offsets = [30, 0], sizes = [1, 128], strides = [1, 1]} : vector<48x128xf32> to vector<1x128xf32>
      %271 = vector.broadcast %269 : vector<1x1xf32> to vector<1x128xf32>
      %272 = arith.mulf %271, %270 : vector<1x128xf32>
      %273 = arith.addf %268, %272 : vector<1x128xf32>
      %274 = vector.extract_strided_slice %114 {offsets = [0, 31], sizes = [1, 1], strides = [1, 1]} : vector<1x48xf32> to vector<1x1xf32>
      %275 = vector.extract_strided_slice %115 {offsets = [31, 0], sizes = [1, 128], strides = [1, 1]} : vector<48x128xf32> to vector<1x128xf32>
      %276 = vector.broadcast %274 : vector<1x1xf32> to vector<1x128xf32>
      %277 = arith.mulf %276, %275 : vector<1x128xf32>
      %278 = arith.addf %273, %277 : vector<1x128xf32>
      %279 = vector.extract_strided_slice %114 {offsets = [0, 32], sizes = [1, 1], strides = [1, 1]} : vector<1x48xf32> to vector<1x1xf32>
      %280 = vector.extract_strided_slice %115 {offsets = [32, 0], sizes = [1, 128], strides = [1, 1]} : vector<48x128xf32> to vector<1x128xf32>
      %281 = vector.broadcast %279 : vector<1x1xf32> to vector<1x128xf32>
      %282 = arith.mulf %281, %280 : vector<1x128xf32>
      %283 = arith.addf %278, %282 : vector<1x128xf32>
      %284 = vector.extract_strided_slice %114 {offsets = [0, 33], sizes = [1, 1], strides = [1, 1]} : vector<1x48xf32> to vector<1x1xf32>
      %285 = vector.extract_strided_slice %115 {offsets = [33, 0], sizes = [1, 128], strides = [1, 1]} : vector<48x128xf32> to vector<1x128xf32>
      %286 = vector.broadcast %284 : vector<1x1xf32> to vector<1x128xf32>
      %287 = arith.mulf %286, %285 : vector<1x128xf32>
      %288 = arith.addf %283, %287 : vector<1x128xf32>
      %289 = vector.extract_strided_slice %114 {offsets = [0, 34], sizes = [1, 1], strides = [1, 1]} : vector<1x48xf32> to vector<1x1xf32>
      %290 = vector.extract_strided_slice %115 {offsets = [34, 0], sizes = [1, 128], strides = [1, 1]} : vector<48x128xf32> to vector<1x128xf32>
      %291 = vector.broadcast %289 : vector<1x1xf32> to vector<1x128xf32>
      %292 = arith.mulf %291, %290 : vector<1x128xf32>
      %293 = arith.addf %288, %292 : vector<1x128xf32>
      %294 = vector.extract_strided_slice %114 {offsets = [0, 35], sizes = [1, 1], strides = [1, 1]} : vector<1x48xf32> to vector<1x1xf32>
      %295 = vector.extract_strided_slice %115 {offsets = [35, 0], sizes = [1, 128], strides = [1, 1]} : vector<48x128xf32> to vector<1x128xf32>
      %296 = vector.broadcast %294 : vector<1x1xf32> to vector<1x128xf32>
      %297 = arith.mulf %296, %295 : vector<1x128xf32>
      %298 = arith.addf %293, %297 : vector<1x128xf32>
      %299 = vector.extract_strided_slice %114 {offsets = [0, 36], sizes = [1, 1], strides = [1, 1]} : vector<1x48xf32> to vector<1x1xf32>
      %300 = vector.extract_strided_slice %115 {offsets = [36, 0], sizes = [1, 128], strides = [1, 1]} : vector<48x128xf32> to vector<1x128xf32>
      %301 = vector.broadcast %299 : vector<1x1xf32> to vector<1x128xf32>
      %302 = arith.mulf %301, %300 : vector<1x128xf32>
      %303 = arith.addf %298, %302 : vector<1x128xf32>
      %304 = vector.extract_strided_slice %114 {offsets = [0, 37], sizes = [1, 1], strides = [1, 1]} : vector<1x48xf32> to vector<1x1xf32>
      %305 = vector.extract_strided_slice %115 {offsets = [37, 0], sizes = [1, 128], strides = [1, 1]} : vector<48x128xf32> to vector<1x128xf32>
      %306 = vector.broadcast %304 : vector<1x1xf32> to vector<1x128xf32>
      %307 = arith.mulf %306, %305 : vector<1x128xf32>
      %308 = arith.addf %303, %307 : vector<1x128xf32>
      %309 = vector.extract_strided_slice %114 {offsets = [0, 38], sizes = [1, 1], strides = [1, 1]} : vector<1x48xf32> to vector<1x1xf32>
      %310 = vector.extract_strided_slice %115 {offsets = [38, 0], sizes = [1, 128], strides = [1, 1]} : vector<48x128xf32> to vector<1x128xf32>
      %311 = vector.broadcast %309 : vector<1x1xf32> to vector<1x128xf32>
      %312 = arith.mulf %311, %310 : vector<1x128xf32>
      %313 = arith.addf %308, %312 : vector<1x128xf32>
      %314 = vector.extract_strided_slice %114 {offsets = [0, 39], sizes = [1, 1], strides = [1, 1]} : vector<1x48xf32> to vector<1x1xf32>
      %315 = vector.extract_strided_slice %115 {offsets = [39, 0], sizes = [1, 128], strides = [1, 1]} : vector<48x128xf32> to vector<1x128xf32>
      %316 = vector.broadcast %314 : vector<1x1xf32> to vector<1x128xf32>
      %317 = arith.mulf %316, %315 : vector<1x128xf32>
      %318 = arith.addf %313, %317 : vector<1x128xf32>
      %319 = vector.extract_strided_slice %114 {offsets = [0, 40], sizes = [1, 1], strides = [1, 1]} : vector<1x48xf32> to vector<1x1xf32>
      %320 = vector.extract_strided_slice %115 {offsets = [40, 0], sizes = [1, 128], strides = [1, 1]} : vector<48x128xf32> to vector<1x128xf32>
      %321 = vector.broadcast %319 : vector<1x1xf32> to vector<1x128xf32>
      %322 = arith.mulf %321, %320 : vector<1x128xf32>
      %323 = arith.addf %318, %322 : vector<1x128xf32>
      %324 = vector.extract_strided_slice %114 {offsets = [0, 41], sizes = [1, 1], strides = [1, 1]} : vector<1x48xf32> to vector<1x1xf32>
      %325 = vector.extract_strided_slice %115 {offsets = [41, 0], sizes = [1, 128], strides = [1, 1]} : vector<48x128xf32> to vector<1x128xf32>
      %326 = vector.broadcast %324 : vector<1x1xf32> to vector<1x128xf32>
      %327 = arith.mulf %326, %325 : vector<1x128xf32>
      %328 = arith.addf %323, %327 : vector<1x128xf32>
      %329 = vector.extract_strided_slice %114 {offsets = [0, 42], sizes = [1, 1], strides = [1, 1]} : vector<1x48xf32> to vector<1x1xf32>
      %330 = vector.extract_strided_slice %115 {offsets = [42, 0], sizes = [1, 128], strides = [1, 1]} : vector<48x128xf32> to vector<1x128xf32>
      %331 = vector.broadcast %329 : vector<1x1xf32> to vector<1x128xf32>
      %332 = arith.mulf %331, %330 : vector<1x128xf32>
      %333 = arith.addf %328, %332 : vector<1x128xf32>
      %334 = vector.extract_strided_slice %114 {offsets = [0, 43], sizes = [1, 1], strides = [1, 1]} : vector<1x48xf32> to vector<1x1xf32>
      %335 = vector.extract_strided_slice %115 {offsets = [43, 0], sizes = [1, 128], strides = [1, 1]} : vector<48x128xf32> to vector<1x128xf32>
      %336 = vector.broadcast %334 : vector<1x1xf32> to vector<1x128xf32>
      %337 = arith.mulf %336, %335 : vector<1x128xf32>
      %338 = arith.addf %333, %337 : vector<1x128xf32>
      %339 = vector.extract_strided_slice %114 {offsets = [0, 44], sizes = [1, 1], strides = [1, 1]} : vector<1x48xf32> to vector<1x1xf32>
      %340 = vector.extract_strided_slice %115 {offsets = [44, 0], sizes = [1, 128], strides = [1, 1]} : vector<48x128xf32> to vector<1x128xf32>
      %341 = vector.broadcast %339 : vector<1x1xf32> to vector<1x128xf32>
      %342 = arith.mulf %341, %340 : vector<1x128xf32>
      %343 = arith.addf %338, %342 : vector<1x128xf32>
      %344 = vector.extract_strided_slice %114 {offsets = [0, 45], sizes = [1, 1], strides = [1, 1]} : vector<1x48xf32> to vector<1x1xf32>
      %345 = vector.extract_strided_slice %115 {offsets = [45, 0], sizes = [1, 128], strides = [1, 1]} : vector<48x128xf32> to vector<1x128xf32>
      %346 = vector.broadcast %344 : vector<1x1xf32> to vector<1x128xf32>
      %347 = arith.mulf %346, %345 : vector<1x128xf32>
      %348 = arith.addf %343, %347 : vector<1x128xf32>
      %349 = vector.extract_strided_slice %114 {offsets = [0, 46], sizes = [1, 1], strides = [1, 1]} : vector<1x48xf32> to vector<1x1xf32>
      %350 = vector.extract_strided_slice %115 {offsets = [46, 0], sizes = [1, 128], strides = [1, 1]} : vector<48x128xf32> to vector<1x128xf32>
      %351 = vector.broadcast %349 : vector<1x1xf32> to vector<1x128xf32>
      %352 = arith.mulf %351, %350 : vector<1x128xf32>
      %353 = arith.addf %348, %352 : vector<1x128xf32>
      %354 = vector.extract_strided_slice %114 {offsets = [0, 47], sizes = [1, 1], strides = [1, 1]} : vector<1x48xf32> to vector<1x1xf32>
      %355 = vector.extract_strided_slice %115 {offsets = [47, 0], sizes = [1, 128], strides = [1, 1]} : vector<48x128xf32> to vector<1x128xf32>
      %356 = vector.broadcast %354 : vector<1x1xf32> to vector<1x128xf32>
      %357 = arith.mulf %356, %355 : vector<1x128xf32>
      %358 = arith.addf %353, %357 : vector<1x128xf32>
      %cst_55 = arith.constant 0.000000e+00 : f32
      %359 = vector.broadcast %cst_55 : f32 to vector<1x128xf32>
      %360 = arith.maximumf %358, %359 : vector<1x128xf32>
      %c0_56 = arith.constant 0 : index
      %c0_57 = arith.constant 0 : index
      %c0_58 = arith.constant 0 : index
      %361 = vector.load %arg5[%c0_56, %c0_57, %c0_58] : memref<1x1x128xf32, #tpu.memory_space<vmem>>, vector<1x1x128xf32>
      %362 = vector.shape_cast %361 : vector<1x1x128xf32> to vector<1x128xf32>
      %363 = vector.shape_cast %360 : vector<1x128xf32> to vector<1x1x128xf32>
      tpu.vector_store %arg5[%c0_56, %c0_57, %c0_58], %363 {strides = array<i32>} : memref<1x1x128xf32, #tpu.memory_space<vmem>>, vector<1x1x128xf32>,
    } else {
    }
    return
  }
  func.func @transform_0(%arg0: i32, %arg1: i32) -> (i32, i32, i32) {
    %c0_i32 = arith.constant 0 : i32
    %c0_i32_0 = arith.constant 0 : i32
    return %arg0, %c0_i32, %arg1 : i32, i32, i32
  }
  func.func @transform_1(%arg0: i32, %arg1: i32) -> (i32, i32) {
    %c0_i32 = arith.constant 0 : i32
    %c0_i32_0 = arith.constant 0 : i32
    %c0_i32_1 = arith.constant 0 : i32
    return %c0_i32, %c0_i32_0 : i32, i32
  }
  func.func @transform_2(%arg0: i32, %arg1: i32) -> (i32, i32) {
    %c0_i32 = arith.constant 0 : i32
    %c0_i32_0 = arith.constant 0 : i32
    %c0_i32_1 = arith.constant 0 : i32
    return %c0_i32, %c0_i32_0 : i32, i32
  }
  func.func @transform_3(%arg0: i32, %arg1: i32) -> (i32, i32, i32) {
    %c0_i32 = arith.constant 0 : i32
    %c0_i32_0 = arith.constant 0 : i32
    %c0_i32_1 = arith.constant 0 : i32
    return %arg0, %c0_i32, %c0_i32_0 : i32, i32, i32
  }
}

</mosaic_0001>

<llo_original>
// kernel: tpu_custom_call.1
$region0: #{tpu_custom_call.1}
  #allocation0 [shape = 'u32[]', space=smem, size = 0x4, offset = 0x4, fixed_abs, tag = 'smem constant byte address 0x4 - core index']
  #allocation1 [shape = 'u32[144,128]{1,0:T(1,128)}', space=vmem, size = 0x12000, scoped, tag = 'internal scratch']
  #allocation2 [shape = 'f32[6,16]{1,0:T(8,128)}', space=vmem, size = 0x1000, scoped, tag = 'scratch operand']
  %s0 = inlined_call_operand.vmem [shape: f32[2,6,128], index: 0, kind: input, shape index: {}]
  %s1 = inlined_call_operand.hbm [shape: f32[48,128], index: 1, kind: input, shape index: {}]
  %s2 = inlined_call_operand.vmem [shape: f32[1,128], index: 2, kind: input, shape index: {}]
  %s3 = inlined_call_operand.hbm [shape: f32[2,1,128], index: 3, kind: output, shape index: {}]
  %s4 = sld [smem:[#allocation0]]
  $region57: #{tpu_custom_call.1} parent=0
    _
  %s6 = ssub.s32 1, %s4
  %s7 = scalar_select 0, %s6, %s4
  $region1: #{tpu_custom_call.1} parent=0
    #allocation3 [shape = 'u8[24576]{0}', space=vmem, size = 0x6000, scoped, tag = 'input window, operand 1, single buffered']
    #allocation4 [shape = 's32[2]{0}', space=sflag, size = 0x8, scoped, tag = 'scoped memory for tpu_custom_call.1']
    #allocation5 [shape = 's32[2]{0}', space=sflag, size = 0x8, scoped, tag = 'scoped memory for tpu_custom_call.1']
    #allocation6 [shape = 'u8[1024]{0}', space=vmem, size = 0x400, scoped, tag = 'output window, operand 0']
    %8 = vsyncpa [#allocation4], 0
    %9 = vsyncpa [#allocation5], 0
    %s10 = scalar_lea.sflag [#allocation5], 1
    %11 = vsyncpa %s10, 0
    loop: start=0, step=1, limit=4
    $region2: #{tpu_custom_call.1} parent=1 // loop_pre_header
      _
    $region3: #{tpu_custom_call.1} parent=1 // loop_header
      %s13 = sphi 0, %s17
      %p14 = scmp.ge.s32.totalorder %s13, 4
      %s20 = sphi 0, %s32
      %s21 = sphi 0, %s28
      %s22 = sphi 0, %s20
      %s23 = sphi 0, %s21
      %s24 = sphi 0, %s22
      %s25 = sphi 0, %s23
      %s37 = sphi 0, %s39
      %s40 = sphi 0, %s37
      %s41 = sphi 0, %s40
      %s57 = sphi 0, %s41
      %s61 = sphi 0, %s61
      %s63 = sphi 0, %s61
      %s64 = sphi 0, %s63
      %s78 = sphi 0, %s64
      %s82 = sphi 0, %s82
      %s84 = sphi 0, %s82
      %s85 = sphi 0, %s84
      %s99 = sphi 0, %s85
      %s105 = sphi 0, %s107
      %s108 = sphi 0, %s105
      %s109 = sphi 0, %s108
      %s125 = sphi 0, %s109
    $region4: #{tpu_custom_call.1} parent=1 // loop_header_branch
      %16 = sbr.rel (%p14) target = $region8
    $region5: #{tpu_custom_call.1} parent=1 // loop_body
      %s18 = ssub.s32 %s13, 1
      %s19 = ssub.s32 %s13, 2
      %s26 = sadd.s32 1, %s21
      %p27 = scmp.ge.s32.totalorder %s26, 1
      %s28 = scalar_select %p27, 0, %s26
      %s29 = sadd.s32 1, %s20
      %s30 = scalar_select %p27, %s29, %s20
      %p31 = scmp.ge.s32.totalorder %s30, 2
      %s32 = scalar_select %p31, 0, %s30
      %s33 = ssub.s32 %s20, %s32
      %s34 = ssub.s32 %s21, %s28
      %s35 = sor.u32 %s33, %s34
      %p36 = scmp.eq.s32.totalorder %s35, 0
      %s38 = sadd.s32 %s37, 1
      %s39 = scalar_select %p36, %s37, %s38
      %p42 = pneg %p36
      %p43 = scmp.eq.s32.totalorder %s13, 1
      %p44 = por %p42, %p43
      %p45 = scmp.ne.s32.totalorder %s37, %s40
      %p46 = scmp.eq.s32.totalorder %s13, 0
      %p47 = por %p45, %p46
      %p48 = scmp.ne.s32.totalorder %s37, %s40
      %p49 = scmp.eq.s32.totalorder %s18, 1
      %p50 = por %p48, %p49
      %p51 = scmp.ne.s32.totalorder %s40, %s41
      %p52 = scmp.eq.s32.totalorder %s18, 0
      %p53 = por %p51, %p52
      %p54 = scmp.ne.s32.totalorder %s40, %s41
      %p55 = scmp.eq.s32.totalorder %s19, 1
      %p56 = por %p54, %p55
      %p58 = scmp.ne.s32.totalorder %s41, %s57
      %p59 = scmp.eq.s32.totalorder %s19, 0
      %p60 = por %p58, %p59
      %s62 = sadd.s32 %s61, 1
      %p65 = scmp.eq.s32.totalorder %s13, 1
      %p66 = scmp.ne.s32.totalorder %s61, %s63
      %p67 = scmp.eq.s32.totalorder %s13, 0
      %p68 = por %p66, %p67
      %p69 = scmp.ne.s32.totalorder %s61, %s63
      %p70 = scmp.eq.s32.totalorder %s18, 1
      %p71 = por %p69, %p70
      %p72 = scmp.ne.s32.totalorder %s63, %s64
      %p73 = scmp.eq.s32.totalorder %s18, 0
      %p74 = por %p72, %p73
      %p75 = scmp.ne.s32.totalorder %s63, %s64
      %p76 = scmp.eq.s32.totalorder %s19, 1
      %p77 = por %p75, %p76
      %p79 = scmp.ne.s32.totalorder %s64, %s78
      %p80 = scmp.eq.s32.totalorder %s19, 0
      %p81 = por %p79, %p80
      %s83 = sadd.s32 %s82, 1
      %p86 = scmp.eq.s32.totalorder %s13, 1
      %p87 = scmp.ne.s32.totalorder %s82, %s84
      %p88 = scmp.eq.s32.totalorder %s13, 0
      %p89 = por %p87, %p88
      %p90 = scmp.ne.s32.totalorder %s82, %s84
      %p91 = scmp.eq.s32.totalorder %s18, 1
      %p92 = por %p90, %p91
      %p93 = scmp.ne.s32.totalorder %s84, %s85
      %p94 = scmp.eq.s32.totalorder %s18, 0
      %p95 = por %p93, %p94
      %p96 = scmp.ne.s32.totalorder %s84, %s85
      %p97 = scmp.eq.s32.totalorder %s19, 1
      %p98 = por %p96, %p97
      %p100 = scmp.ne.s32.totalorder %s85, %s99
      %p101 = scmp.eq.s32.totalorder %s19, 0
      %p102 = por %p100, %p101
      %s103 = ssub.s32 %s20, %s32
      %p104 = scmp.eq.s32.totalorder %s103, 0
      %s106 = sadd.s32 %s105, 1
      %s107 = scalar_select %p104, %s105, %s106
      %p110 = pneg %p104
      %p111 = scmp.eq.s32.totalorder %s13, 1
      %p112 = por %p110, %p111
      %p113 = scmp.ne.s32.totalorder %s105, %s108
      %p114 = scmp.eq.s32.totalorder %s13, 0
      %p115 = por %p113, %p114
      %p116 = scmp.ne.s32.totalorder %s105, %s108
      %p117 = scmp.eq.s32.totalorder %s18, 1
      %p118 = por %p116, %p117
      %p119 = scmp.ne.s32.totalorder %s108, %s109
      %p120 = scmp.eq.s32.totalorder %s18, 0
      %p121 = por %p119, %p120
      %p122 = scmp.ne.s32.totalorder %s108, %s109
      %p123 = scmp.eq.s32.totalorder %s19, 1
      %p124 = por %p122, %p123
      %p126 = scmp.ne.s32.totalorder %s109, %s125
      %p127 = scmp.eq.s32.totalorder %s19, 0
      %p128 = por %p126, %p127
      %p129 = scmp.le.s32.totalorder 1, %s13
      %p130 = scmp.lt.s32.totalorder %s13, 3
      %p131 = pnand %p129, %p130
      %p132 = pneg %p131
      // Predicated region
      $region9: #{tpu_custom_call.1} parent=5 // pred_check
        _
      $region10: #{tpu_custom_call.1} parent=5 // pred_check_branch
        %134 = sbr.rel (%p131) target = $region12
      $region11: #{tpu_custom_call.1} parent=5 // pred_region
        %s135 = ssub.s32 %s13, 1
        // Predicated region
        $region13: #{tpu_custom_call.1} parent=11 // pred_check
          %p136 = pneg %p74
        $region14: #{tpu_custom_call.1} parent=11 // pred_check_branch
          %138 = sbr.rel (%p136) target = $region16
        $region15: #{tpu_custom_call.1} parent=11 // pred_region
          %s140 = ssub.s32 768, 768
          %141 = vsyncadd [#allocation4], %s140
          %s142 = sshll.u32 [#allocation3], 4
          %s143 = int_to_ptr.vmem [resolvable:$true] %s142
          %148 = dma.hbm_to_vmem [thread:$0]  %s1, 768, %s143, [#allocation4], 128, 128, 8
        $region16: #{tpu_custom_call.1} parent=11 // pred_fallthru
          _
        // Predicated region
        $region17: #{tpu_custom_call.1} parent=11 // pred_check
          %p149 = pneg %p95
        $region18: #{tpu_custom_call.1} parent=11 // pred_check_branch
          %151 = sbr.rel (%p149) target = $region20
        $region19: #{tpu_custom_call.1} parent=11 // pred_region
          _
        $region20: #{tpu_custom_call.1} parent=11 // pred_fallthru
          _
      $region12: #{tpu_custom_call.1} parent=5 // pred_fallthru
        _
      %p152 = scmp.lt.s32.totalorder %s13, 2
      // Predicated region
      $region21: #{tpu_custom_call.1} parent=5 // pred_check
        %p153 = pneg %p152
      $region22: #{tpu_custom_call.1} parent=5 // pred_check_branch
        %155 = sbr.rel (%p153) target = $region24
      $region23: #{tpu_custom_call.1} parent=5 // pred_region
        // Predicated region
        $region25: #{tpu_custom_call.1} parent=23 // pred_check
          %p156 = pneg %p47
        $region26: #{tpu_custom_call.1} parent=23 // pred_check_branch
          %158 = sbr.rel (%p156) target = $region28
        $region27: #{tpu_custom_call.1} parent=23 // pred_region
          %p159 = scmp.lt.s32.totalorder %s20, 1
          %s160 = scalar_select %p159, %s20, 1
          %p161 = scmp.lt.s32.totalorder %s21, 0
          %s162 = scalar_select %p161, %s21, 0
          %s163 = sadd.s32 %s162, %s160
          %s164 = smul.addr %s163, 8
          %s165 = scalar_lea.vmem %s0, %s164
        $region28: #{tpu_custom_call.1} parent=23 // pred_fallthru
          _
      $region24: #{tpu_custom_call.1} parent=5 // pred_fallthru
        _
      %p166 = scmp.le.s32.totalorder 1, %s13
      %p167 = scmp.lt.s32.totalorder %s13, 3
      %p168 = pnand %p166, %p167
      %p169 = pneg %p168
      // Predicated region
      $region29: #{tpu_custom_call.1} parent=5 // pred_check
        _
      $region30: #{tpu_custom_call.1} parent=5 // pred_check_branch
        %171 = sbr.rel (%p168) target = $region32
      $region31: #{tpu_custom_call.1} parent=5 // pred_region
        %s172 = ssub.s32 %s13, 1
        // Predicated region
        $region33: #{tpu_custom_call.1} parent=31 // pred_check
          %p173 = pneg %p74
        $region34: #{tpu_custom_call.1} parent=31 // pred_check_branch
          %175 = sbr.rel (%p173) target = $region36
        $region35: #{tpu_custom_call.1} parent=31 // pred_region
          %176 = dma.done [#allocation4], 768
        $region36: #{tpu_custom_call.1} parent=31 // pred_fallthru
          _
        %p177 = scmp.lt.s32.totalorder %s22, 1
        %s178 = scalar_select %p177, %s22, 1
        %p179 = scmp.lt.s32.totalorder %s23, 0
        %s180 = scalar_select %p179, %s23, 0
        %s181 = sadd.s32 %s180, %s178
        %s182 = smul.addr %s181, 8
        %s183 = scalar_lea.vmem %s0, %s182
        %p184 = pneg %p53
        %p185 = pneg %p50
        %p186 = pneg %p74
        %p187 = pneg %p71
        %p188 = pneg %p95
        %p189 = pneg %p92
        %p190 = pneg %p121
        %p191 = pneg %p118
        %s192 = sand.u32 %s108, 1
        %s193 = scalar_lea.sflag [#allocation5], %s192
        %s194 = sand.u32 %s108, 1
        %s195 = scalar_lea.vmem [#allocation6], %s194
        %p196 = scmp.lt.s32.totalorder %s22, 1
        %s197 = scalar_select %p196, %s22, 1
        %p198 = scmp.lt.s32.totalorder %s23, 0
        %s199 = scalar_select %p198, %s23, 0
        %s200 = sadd.s32 %s199, %s197
        %s201 = smul.addr %s200, 8
        %s202 = scalar_lea.vmem %s0, %s201
        %p203 = scmp.eq.s32.totalorder %s23, 0
        // Predicated region
        $region37: #{tpu_custom_call.1} parent=31 // pred_check
          %p204 = pneg %p203
        $region38: #{tpu_custom_call.1} parent=31 // pred_check_branch
          %206 = sbr.rel (%p204) target = $region40
        $region39: #{tpu_custom_call.1} parent=31 // pred_region
          %vm207 = vcmask 128000
          %208 = vst.msk [vmem:[#allocation2] sm:$0x3f] %vm207, 0.0
        $region40: #{tpu_custom_call.1} parent=31 // pred_fallthru
          _
        %v209 = vld [vmem:[%s202] sm:$0x3f]
        %v210 = vmul.f32 %v209, 16.0
        %v211 = vfloor.f32 %v210
        %v212 = vmin.f32 %v211, 15.0
        %vm213 = vcmp.gt.f32.partialorder %v209, 1.0
        %v214 = vsel %vm213, -1.0, %v212
        %vm215 = vcmp.eq.f32.partialorder %v214, 0.0
        %v216 = vsel %vm215, 1, 0
        %vm217 = vcmask 1045504
        %v218 = vsel %vm217, %v216, 0
        %v219 = vand.u32 %v218, 65535
        %v220 = vshrl.u32 %v218, 16
        %v221 = vcvt.s32.f32 %v219
        %v222 = vcvt.s32.f32 %v220
        %223 = vadd.xlane.f32.xlu0 %v221
        %v224 = vpop.xlane.xlu0 %223
        %225 = vadd.xlane.f32.xlu0 %v222
        %v226 = vpop.xlane.xlu0 %225
        %v227 = vcvt.f32.s32 %v224
        %v228 = vcvt.f32.s32 %v226
        %v229 = vshll.u32 %v228, 16
        %v230 = vadd.s32 %v229, %v227
        %vm231 = vcmp.eq.f32.partialorder %v214, 1.0
        %v232 = vsel %vm231, 1, 0
        %v233 = vsel %vm217, %v232, 0
        %v234 = vand.u32 %v233, 65535
        %v235 = vshrl.u32 %v233, 16
        %v236 = vcvt.s32.f32 %v234
        %v237 = vcvt.s32.f32 %v235
        %238 = vadd.xlane.f32.xlu0 %v236
        %v239 = vpop.xlane.xlu0 %238
        %240 = vadd.xlane.f32.xlu0 %v237
        %v241 = vpop.xlane.xlu0 %240
        %v242 = vcvt.f32.s32 %v239
        %v243 = vcvt.f32.s32 %v241
        %v244 = vshll.u32 %v243, 16
        %v245 = vadd.s32 %v244, %v242
        %vm246 = vcmp.eq.f32.partialorder %v214, 2.0
        %v247 = vsel %vm246, 1, 0
        %v248 = vsel %vm217, %v247, 0
        %v249 = vand.u32 %v248, 65535
        %v250 = vshrl.u32 %v248, 16
        %v251 = vcvt.s32.f32 %v249
        %v252 = vcvt.s32.f32 %v250
        %253 = vadd.xlane.f32.xlu0 %v251
        %v254 = vpop.xlane.xlu0 %253
        %255 = vadd.xlane.f32.xlu0 %v252
        %v256 = vpop.xlane.xlu0 %255
        %v257 = vcvt.f32.s32 %v254
        %v258 = vcvt.f32.s32 %v256
        %v259 = vshll.u32 %v258, 16
        %v260 = vadd.s32 %v259, %v257
        %vm261 = vcmp.eq.f32.partialorder %v214, 3.0
        %v262 = vsel %vm261, 1, 0
        %v263 = vsel %vm217, %v262, 0
        %v264 = vand.u32 %v263, 65535
        %v265 = vshrl.u32 %v263, 16
        %v266 = vcvt.s32.f32 %v264
        %v267 = vcvt.s32.f32 %v265
        %268 = vadd.xlane.f32.xlu0 %v266
        %v269 = vpop.xlane.xlu0 %268
        %270 = vadd.xlane.f32.xlu0 %v267
        %v271 = vpop.xlane.xlu0 %270
        %v272 = vcvt.f32.s32 %v269
        %v273 = vcvt.f32.s32 %v271
        %v274 = vshll.u32 %v273, 16
        %v275 = vadd.s32 %v274, %v272
        %vm276 = vcmp.eq.f32.partialorder %v214, 4.0
        %v277 = vsel %vm276, 1, 0
        %v278 = vsel %vm217, %v277, 0
        %v279 = vand.u32 %v278, 65535
        %v280 = vshrl.u32 %v278, 16
        %v281 = vcvt.s32.f32 %v279
        %v282 = vcvt.s32.f32 %v280
        %283 = vadd.xlane.f32.xlu0 %v281
        %v284 = vpop.xlane.xlu0 %283
        %285 = vadd.xlane.f32.xlu0 %v282
        %v286 = vpop.xlane.xlu0 %285
        %v287 = vcvt.f32.s32 %v284
        %v288 = vcvt.f32.s32 %v286
        %v289 = vshll.u32 %v288, 16
        %v290 = vadd.s32 %v289, %v287
        %vm291 = vcmp.eq.f32.partialorder %v214, 5.0
        %v292 = vsel %vm291, 1, 0
        %v293 = vsel %vm217, %v292, 0
        %v294 = vand.u32 %v293, 65535
        %v295 = vshrl.u32 %v293, 16
        %v296 = vcvt.s32.f32 %v294
        %v297 = vcvt.s32.f32 %v295
        %298 = vadd.xlane.f32.xlu0 %v296
        %v299 = vpop.xlane.xlu0 %298
        %300 = vadd.xlane.f32.xlu0 %v297
        %v301 = vpop.xlane.xlu0 %300
        %v302 = vcvt.f32.s32 %v299
        %v303 = vcvt.f32.s32 %v301
        %v304 = vshll.u32 %v303, 16
        %v305 = vadd.s32 %v304, %v302
        %vm306 = vcmp.eq.f32.partialorder %v214, 6.0
        %v307 = vsel %vm306, 1, 0
        %v308 = vsel %vm217, %v307, 0
        %v309 = vand.u32 %v308, 65535
        %v310 = vshrl.u32 %v308, 16
        %v311 = vcvt.s32.f32 %v309
        %v312 = vcvt.s32.f32 %v310
        %313 = vadd.xlane.f32.xlu0 %v311
        %v314 = vpop.xlane.xlu0 %313
        %315 = vadd.xlane.f32.xlu0 %v312
        %v316 = vpop.xlane.xlu0 %315
        %v317 = vcvt.f32.s32 %v314
        %v318 = vcvt.f32.s32 %v316
        %v319 = vshll.u32 %v318, 16
        %v320 = vadd.s32 %v319, %v317
        %vm321 = vcmp.eq.f32.partialorder %v214, 7.0
        %v322 = vsel %vm321, 1, 0
        %v323 = vsel %vm217, %v322, 0
        %v324 = vand.u32 %v323, 65535
        %v325 = vshrl.u32 %v323, 16
        %v326 = vcvt.s32.f32 %v324
        %v327 = vcvt.s32.f32 %v325
        %328 = vadd.xlane.f32.xlu0 %v326
        %v329 = vpop.xlane.xlu0 %328
        %330 = vadd.xlane.f32.xlu0 %v327
        %v331 = vpop.xlane.xlu0 %330
        %v332 = vcvt.f32.s32 %v329
        %v333 = vcvt.f32.s32 %v331
        %v334 = vshll.u32 %v333, 16
        %v335 = vadd.s32 %v334, %v332
        %vm336 = vcmp.eq.f32.partialorder %v214, 8.0
        %v337 = vsel %vm336, 1, 0
        %v338 = vsel %vm217, %v337, 0
        %v339 = vand.u32 %v338, 65535
        %v340 = vshrl.u32 %v338, 16
        %v341 = vcvt.s32.f32 %v339
        %v342 = vcvt.s32.f32 %v340
        %343 = vadd.xlane.f32.xlu0 %v341
        %v344 = vpop.xlane.xlu0 %343
        %345 = vadd.xlane.f32.xlu0 %v342
        %v346 = vpop.xlane.xlu0 %345
        %v347 = vcvt.f32.s32 %v344
        %v348 = vcvt.f32.s32 %v346
        %v349 = vshll.u32 %v348, 16
        %v350 = vadd.s32 %v349, %v347
        %vm351 = vcmp.eq.f32.partialorder %v214, 9.0
        %v352 = vsel %vm351, 1, 0
        %v353 = vsel %vm217, %v352, 0
        %v354 = vand.u32 %v353, 65535
        %v355 = vshrl.u32 %v353, 16
        %v356 = vcvt.s32.f32 %v354
        %v357 = vcvt.s32.f32 %v355
        %358 = vadd.xlane.f32.xlu0 %v356
        %v359 = vpop.xlane.xlu0 %358
        %360 = vadd.xlane.f32.xlu0 %v357
        %v361 = vpop.xlane.xlu0 %360
        %v362 = vcvt.f32.s32 %v359
        %v363 = vcvt.f32.s32 %v361
        %v364 = vshll.u32 %v363, 16
        %v365 = vadd.s32 %v364, %v362
        %vm366 = vcmp.eq.f32.partialorder %v214, 10.0
        %v367 = vsel %vm366, 1, 0
        %v368 = vsel %vm217, %v367, 0
        %v369 = vand.u32 %v368, 65535
        %v370 = vshrl.u32 %v368, 16
        %v371 = vcvt.s32.f32 %v369
        %v372 = vcvt.s32.f32 %v370
        %373 = vadd.xlane.f32.xlu0 %v371
        %v374 = vpop.xlane.xlu0 %373
        %375 = vadd.xlane.f32.xlu0 %v372
        %v376 = vpop.xlane.xlu0 %375
        %v377 = vcvt.f32.s32 %v374
        %v378 = vcvt.f32.s32 %v376
        %v379 = vshll.u32 %v378, 16
        %v380 = vadd.s32 %v379, %v377
        %vm381 = vcmp.eq.f32.partialorder %v214, 11.0
        %v382 = vsel %vm381, 1, 0
        %v383 = vsel %vm217, %v382, 0
        %v384 = vand.u32 %v383, 65535
        %v385 = vshrl.u32 %v383, 16
        %v386 = vcvt.s32.f32 %v384
        %v387 = vcvt.s32.f32 %v385
        %388 = vadd.xlane.f32.xlu0 %v386
        %v389 = vpop.xlane.xlu0 %388
        %390 = vadd.xlane.f32.xlu0 %v387
        %v391 = vpop.xlane.xlu0 %390
        %v392 = vcvt.f32.s32 %v389
        %v393 = vcvt.f32.s32 %v391
        %v394 = vshll.u32 %v393, 16
        %v395 = vadd.s32 %v394, %v392
        %vm396 = vcmp.eq.f32.partialorder %v214, 12.0
        %v397 = vsel %vm396, 1, 0
        %v398 = vsel %vm217, %v397, 0
        %v399 = vand.u32 %v398, 65535
        %v400 = vshrl.u32 %v398, 16
        %v401 = vcvt.s32.f32 %v399
        %v402 = vcvt.s32.f32 %v400
        %403 = vadd.xlane.f32.xlu0 %v401
        %v404 = vpop.xlane.xlu0 %403
        %405 = vadd.xlane.f32.xlu0 %v402
        %v406 = vpop.xlane.xlu0 %405
        %v407 = vcvt.f32.s32 %v404
        %v408 = vcvt.f32.s32 %v406
        %v409 = vshll.u32 %v408, 16
        %v410 = vadd.s32 %v409, %v407
        %vm411 = vcmp.eq.f32.partialorder %v214, 13.0
        %v412 = vsel %vm411, 1, 0
        %v413 = vsel %vm217, %v412, 0
        %v414 = vand.u32 %v413, 65535
        %v415 = vshrl.u32 %v413, 16
        %v416 = vcvt.s32.f32 %v414
        %v417 = vcvt.s32.f32 %v415
        %418 = vadd.xlane.f32.xlu0 %v416
        %v419 = vpop.xlane.xlu0 %418
        %420 = vadd.xlane.f32.xlu0 %v417
        %v421 = vpop.xlane.xlu0 %420
        %v422 = vcvt.f32.s32 %v419
        %v423 = vcvt.f32.s32 %v421
        %v424 = vshll.u32 %v423, 16
        %v425 = vadd.s32 %v424, %v422
        %vm426 = vcmp.eq.f32.partialorder %v214, 14.0
        %v427 = vsel %vm426, 1, 0
        %v428 = vsel %vm217, %v427, 0
        %v429 = vand.u32 %v428, 65535
        %v430 = vshrl.u32 %v428, 16
        %v431 = vcvt.s32.f32 %v429
        %v432 = vcvt.s32.f32 %v430
        %433 = vadd.xlane.f32.xlu0 %v431
        %v434 = vpop.xlane.xlu0 %433
        %435 = vadd.xlane.f32.xlu0 %v432
        %v436 = vpop.xlane.xlu0 %435
        %v437 = vcvt.f32.s32 %v434
        %v438 = vcvt.f32.s32 %v436
        %v439 = vshll.u32 %v438, 16
        %v440 = vadd.s32 %v439, %v437
        %vm441 = vcmp.eq.f32.partialorder %v214, 15.0
        %v442 = vsel %vm441, 1, 0
        %v443 = vsel %vm217, %v442, 0
        %v444 = vand.u32 %v443, 65535
        %v445 = vshrl.u32 %v443, 16
        %v446 = vcvt.s32.f32 %v444
        %v447 = vcvt.s32.f32 %v445
        %448 = vadd.xlane.f32.xlu0 %v446
        %v449 = vpop.xlane.xlu0 %448
        %450 = vadd.xlane.f32.xlu0 %v447
        %v451 = vpop.xlane.xlu0 %450
        %v452 = vcvt.f32.s32 %v449
        %v453 = vcvt.f32.s32 %v451
        %v454 = vshll.u32 %v453, 16
        %v455 = vadd.s32 %v454, %v452
        %vm456 = vcmask 7168
        %v457 = vsel %vm456, %v230, %v245
        %vm458 = vcmask 15360
        %v459 = vsel %vm458, %v457, %v260
        %vm460 = vcmask 23552
        %v461 = vsel %vm460, %v459, %v275
        %vm462 = vcmask 31744
        %v463 = vsel %vm462, %v461, %v290
        %vm464 = vcmask 39936
        %v465 = vsel %vm464, %v463, %v305
        %vm466 = vcmask 48128
        %v467 = vsel %vm466, %v465, %v320
        %vm468 = vcmask 56320
        %v469 = vsel %vm468, %v467, %v335
        %vm470 = vcmask 64512
        %v471 = vsel %vm470, %v469, %v350
        %vm472 = vcmask 72704
        %v473 = vsel %vm472, %v471, %v365
        %vm474 = vcmask 80896
        %v475 = vsel %vm474, %v473, %v380
        %vm476 = vcmask 89088
        %v477 = vsel %vm476, %v475, %v395
        %vm478 = vcmask 97280
        %v479 = vsel %vm478, %v477, %v410
        %vm480 = vcmask 105472
        %v481 = vsel %vm480, %v479, %v425
        %vm482 = vcmask 113664
        %v483 = vsel %vm482, %v481, %v440
        %vm484 = vcmask 121856
        %v485 = vsel %vm484, %v483, %v455
        %v486 = vld [vmem:[#allocation2] sm:$0x3f]
        %v487 = vcvt.s32.f32 %v485
        %v488 = vadd.f32 %v486, %v487
        %vm489 = vcmask 128000
        %490 = vst.msk [vmem:[#allocation2] sm:$0x3f] %vm489, %v488
        // Predicated region
        $region41: #{tpu_custom_call.1} parent=31 // pred_check
          %p491 = pneg %p203
        $region42: #{tpu_custom_call.1} parent=31 // pred_check_branch
          %493 = sbr.rel (%p491) target = $region44
        $region43: #{tpu_custom_call.1} parent=31 // pred_region
          %v494 = vld [vmem:[#allocation2] sm:$0x3f]
          %vm495 = vcmask 123904
          %v496 = vsel %vm495, %v494, 0.0
          %v497 = vrot.slane %v496, 4
          %v498 = vadd.f32 %v496, %v497
          %v499 = vrot.slane %v498, 2
          %v500 = vadd.f32 %v498, %v499
          %v501 = vrot.slane %v500, 1
          %v502 = vadd.f32 %v500, %v501
          %v504 = vrot.slane %v494, 2
          %v506 = vsel %vm495, %v504, 0.0
          %v507 = vrot.slane %v506, 4
          %v508 = vadd.f32 %v506, %v507
          %v509 = vrot.slane %v508, 2
          %v510 = vadd.f32 %v508, %v509
          %v511 = vrot.slane %v510, 1
          %v512 = vadd.f32 %v510, %v511
          %v513 = vrot.slane %v494, 4
          %v515 = vsel %vm495, %v513, 0.0
          %v516 = vrot.slane %v515, 4
          %v517 = vadd.f32 %v515, %v516
          %v518 = vrot.slane %v517, 2
          %v519 = vadd.f32 %v517, %v518
          %v520 = vrot.slane %v519, 1
          %v521 = vadd.f32 %v519, %v520
          %523 = vrot.lane.b32.xlu0 %v512, 16
          %v524 = vpop.permute.xlu0 %523
          %527 = vrot.lane.b32.xlu0 %v521, 32
          %v528 = vpop.permute.xlu0 %527
          %vm530 = vcmask 130048
          %v531 = vsel %vm530, %v502, %v524
          %vm532 = vcmask 261120
          %v533 = vsel %vm532, %v531, %v528
          %v534 = vld [vmem:[#allocation3] sm:$0xff]
          %v535 = vld [vmem:[#allocation3 + $0x8] sm:$0xff]
          %v536 = vld [vmem:[#allocation3 + $0x10] sm:$0xff]
          %v537 = vld [vmem:[#allocation3 + $0x18] sm:$0xff]
          %v538 = vld [vmem:[#allocation3 + $0x20] sm:$0xff]
          %v539 = vld [vmem:[#allocation3 + $0x28] sm:$0xff]
          %v540 = vld [vmem:[%s2] sm:$0x1]
          %v541 = vadd.f32 %v540, 0.0
          %543 = vset.pattern.permute.xlu0 0
          %544 = vperm.xlu0 %543, %v533
          %v545 = vpop.permute.xlu0 %544
          %v547 = vmul.f32 %v545, %v534
          %v548 = vadd.f32 %v541, %v547
          %549 = vset.pattern.permute.xlu0 1
          %550 = vperm.xlu0 %549, %v533
          %v551 = vpop.permute.xlu0 %550
          %v554 = vrot.slane %v534, 1
          %v556 = vmul.f32 %v551, %v554
          %v557 = vadd.f32 %v548, %v556
          %558 = vset.pattern.permute.xlu0 2
          %559 = vperm.xlu0 %558, %v533
          %v560 = vpop.permute.xlu0 %559
          %v562 = vrot.slane %v534, 2
          %v564 = vmul.f32 %v560, %v562
          %v565 = vadd.f32 %v557, %v564
          %566 = vset.pattern.permute.xlu0 3
          %567 = vperm.xlu0 %566, %v533
          %v568 = vpop.permute.xlu0 %567
          %v570 = vrot.slane %v534, 3
          %v572 = vmul.f32 %v568, %v570
          %v573 = vadd.f32 %v565, %v572
          %574 = vset.pattern.permute.xlu0 4
          %575 = vperm.xlu0 %574, %v533
          %v576 = vpop.permute.xlu0 %575
          %v578 = vrot.slane %v534, 4
          %v580 = vmul.f32 %v576, %v578
          %v581 = vadd.f32 %v573, %v580
          %582 = vset.pattern.permute.xlu0 5
          %583 = vperm.xlu0 %582, %v533
          %v584 = vpop.permute.xlu0 %583
          %v586 = vrot.slane %v534, 5
          %v588 = vmul.f32 %v584, %v586
          %v589 = vadd.f32 %v581, %v588
          %590 = vset.pattern.permute.xlu0 6
          %591 = vperm.xlu0 %590, %v533
          %v592 = vpop.permute.xlu0 %591
          %v594 = vrot.slane %v534, 6
          %v596 = vmul.f32 %v592, %v594
          %v597 = vadd.f32 %v589, %v596
          %598 = vset.pattern.permute.xlu0 7
          %599 = vperm.xlu0 %598, %v533
          %v600 = vpop.permute.xlu0 %599
          %v602 = vrot.slane %v534, 7
          %v604 = vmul.f32 %v600, %v602
          %v605 = vadd.f32 %v597, %v604
          %606 = vset.pattern.permute.xlu0 8
          %607 = vperm.xlu0 %606, %v533
          %v608 = vpop.permute.xlu0 %607
          %v610 = vmul.f32 %v608, %v535
          %v611 = vadd.f32 %v605, %v610
          %612 = vset.pattern.permute.xlu0 9
          %613 = vperm.xlu0 %612, %v533
          %v614 = vpop.permute.xlu0 %613
          %v617 = vrot.slane %v535, 1
          %v619 = vmul.f32 %v614, %v617
          %v620 = vadd.f32 %v611, %v619
          %621 = vset.pattern.permute.xlu0 10
          %622 = vperm.xlu0 %621, %v533
          %v623 = vpop.permute.xlu0 %622
          %v625 = vrot.slane %v535, 2
          %v627 = vmul.f32 %v623, %v625
          %v628 = vadd.f32 %v620, %v627
          %629 = vset.pattern.permute.xlu0 11
          %630 = vperm.xlu0 %629, %v533
          %v631 = vpop.permute.xlu0 %630
          %v633 = vrot.slane %v535, 3
          %v635 = vmul.f32 %v631, %v633
          %v636 = vadd.f32 %v628, %v635
          %637 = vset.pattern.permute.xlu0 12
          %638 = vperm.xlu0 %637, %v533
          %v639 = vpop.permute.xlu0 %638
          %v641 = vrot.slane %v535, 4
          %v643 = vmul.f32 %v639, %v641
          %v644 = vadd.f32 %v636, %v643
          %645 = vset.pattern.permute.xlu0 13
          %646 = vperm.xlu0 %645, %v533
          %v647 = vpop.permute.xlu0 %646
          %v649 = vrot.slane %v535, 5
          %v651 = vmul.f32 %v647, %v649
          %v652 = vadd.f32 %v644, %v651
          %653 = vset.pattern.permute.xlu0 14
          %654 = vperm.xlu0 %653, %v533
          %v655 = vpop.permute.xlu0 %654
          %v657 = vrot.slane %v535, 6
          %v659 = vmul.f32 %v655, %v657
          %v660 = vadd.f32 %v652, %v659
          %661 = vset.pattern.permute.xlu0 15
          %662 = vperm.xlu0 %661, %v533
          %v663 = vpop.permute.xlu0 %662
          %v665 = vrot.slane %v535, 7
          %v667 = vmul.f32 %v663, %v665
          %v668 = vadd.f32 %v660, %v667
          %669 = vset.pattern.permute.xlu0 16
          %670 = vperm.xlu0 %669, %v533
          %v671 = vpop.permute.xlu0 %670
          %v673 = vmul.f32 %v671, %v536
          %v674 = vadd.f32 %v668, %v673
          %675 = vset.pattern.permute.xlu0 17
          %676 = vperm.xlu0 %675, %v533
          %v677 = vpop.permute.xlu0 %676
          %v680 = vrot.slane %v536, 1
          %v682 = vmul.f32 %v677, %v680
          %v683 = vadd.f32 %v674, %v682
          %684 = vset.pattern.permute.xlu0 18
          %685 = vperm.xlu0 %684, %v533
          %v686 = vpop.permute.xlu0 %685
          %v688 = vrot.slane %v536, 2
          %v690 = vmul.f32 %v686, %v688
          %v691 = vadd.f32 %v683, %v690
          %692 = vset.pattern.permute.xlu0 19
          %693 = vperm.xlu0 %692, %v533
          %v694 = vpop.permute.xlu0 %693
          %v696 = vrot.slane %v536, 3
          %v698 = vmul.f32 %v694, %v696
          %v699 = vadd.f32 %v691, %v698
          %700 = vset.pattern.permute.xlu0 20
          %701 = vperm.xlu0 %700, %v533
          %v702 = vpop.permute.xlu0 %701
          %v704 = vrot.slane %v536, 4
          %v706 = vmul.f32 %v702, %v704
          %v707 = vadd.f32 %v699, %v706
          %708 = vset.pattern.permute.xlu0 21
          %709 = vperm.xlu0 %708, %v533
          %v710 = vpop.permute.xlu0 %709
          %v712 = vrot.slane %v536, 5
          %v714 = vmul.f32 %v710, %v712
          %v715 = vadd.f32 %v707, %v714
          %716 = vset.pattern.permute.xlu0 22
          %717 = vperm.xlu0 %716, %v533
          %v718 = vpop.permute.xlu0 %717
          %v720 = vrot.slane %v536, 6
          %v722 = vmul.f32 %v718, %v720
          %v723 = vadd.f32 %v715, %v722
          %724 = vset.pattern.permute.xlu0 23
          %725 = vperm.xlu0 %724, %v533
          %v726 = vpop.permute.xlu0 %725
          %v728 = vrot.slane %v536, 7
          %v730 = vmul.f32 %v726, %v728
          %v731 = vadd.f32 %v723, %v730
          %732 = vset.pattern.permute.xlu0 24
          %733 = vperm.xlu0 %732, %v533
          %v734 = vpop.permute.xlu0 %733
          %v736 = vmul.f32 %v734, %v537
          %v737 = vadd.f32 %v731, %v736
          %738 = vset.pattern.permute.xlu0 25
          %739 = vperm.xlu0 %738, %v533
          %v740 = vpop.permute.xlu0 %739
          %v743 = vrot.slane %v537, 1
          %v745 = vmul.f32 %v740, %v743
          %v746 = vadd.f32 %v737, %v745
          %747 = vset.pattern.permute.xlu0 26
          %748 = vperm.xlu0 %747, %v533
          %v749 = vpop.permute.xlu0 %748
          %v751 = vrot.slane %v537, 2
          %v753 = vmul.f32 %v749, %v751
          %v754 = vadd.f32 %v746, %v753
          %755 = vset.pattern.permute.xlu0 27
          %756 = vperm.xlu0 %755, %v533
          %v757 = vpop.permute.xlu0 %756
          %v759 = vrot.slane %v537, 3
          %v761 = vmul.f32 %v757, %v759
          %v762 = vadd.f32 %v754, %v761
          %763 = vset.pattern.permute.xlu0 28
          %764 = vperm.xlu0 %763, %v533
          %v765 = vpop.permute.xlu0 %764
          %v767 = vrot.slane %v537, 4
          %v769 = vmul.f32 %v765, %v767
          %v770 = vadd.f32 %v762, %v769
          %771 = vset.pattern.permute.xlu0 29
          %772 = vperm.xlu0 %771, %v533
          %v773 = vpop.permute.xlu0 %772
          %v775 = vrot.slane %v537, 5
          %v777 = vmul.f32 %v773, %v775
          %v778 = vadd.f32 %v770, %v777
          %779 = vset.pattern.permute.xlu0 30
          %780 = vperm.xlu0 %779, %v533
          %v781 = vpop.permute.xlu0 %780
          %v783 = vrot.slane %v537, 6
          %v785 = vmul.f32 %v781, %v783
          %v786 = vadd.f32 %v778, %v785
          %787 = vset.pattern.permute.xlu0 31
          %788 = vperm.xlu0 %787, %v533
          %v789 = vpop.permute.xlu0 %788
          %v791 = vrot.slane %v537, 7
          %v793 = vmul.f32 %v789, %v791
          %v794 = vadd.f32 %v786, %v793
          %795 = vset.pattern.permute.xlu0 32
          %796 = vperm.xlu0 %795, %v533
          %v797 = vpop.permute.xlu0 %796
          %v799 = vmul.f32 %v797, %v538
          %v800 = vadd.f32 %v794, %v799
          %801 = vset.pattern.permute.xlu0 33
          %802 = vperm.xlu0 %801, %v533
          %v803 = vpop.permute.xlu0 %802
          %v806 = vrot.slane %v538, 1
          %v808 = vmul.f32 %v803, %v806
          %v809 = vadd.f32 %v800, %v808
          %810 = vset.pattern.permute.xlu0 34
          %811 = vperm.xlu0 %810, %v533
          %v812 = vpop.permute.xlu0 %811
          %v814 = vrot.slane %v538, 2
          %v816 = vmul.f32 %v812, %v814
          %v817 = vadd.f32 %v809, %v816
          %818 = vset.pattern.permute.xlu0 35
          %819 = vperm.xlu0 %818, %v533
          %v820 = vpop.permute.xlu0 %819
          %v822 = vrot.slane %v538, 3
          %v824 = vmul.f32 %v820, %v822
          %v825 = vadd.f32 %v817, %v824
          %826 = vset.pattern.permute.xlu0 36
          %827 = vperm.xlu0 %826, %v533
          %v828 = vpop.permute.xlu0 %827
          %v830 = vrot.slane %v538, 4
          %v832 = vmul.f32 %v828, %v830
          %v833 = vadd.f32 %v825, %v832
          %834 = vset.pattern.permute.xlu0 37
          %835 = vperm.xlu0 %834, %v533
          %v836 = vpop.permute.xlu0 %835
          %v838 = vrot.slane %v538, 5
          %v840 = vmul.f32 %v836, %v838
          %v841 = vadd.f32 %v833, %v840
          %842 = vset.pattern.permute.xlu0 38
          %843 = vperm.xlu0 %842, %v533
          %v844 = vpop.permute.xlu0 %843
          %v846 = vrot.slane %v538, 6
          %v848 = vmul.f32 %v844, %v846
          %v849 = vadd.f32 %v841, %v848
          %850 = vset.pattern.permute.xlu0 39
          %851 = vperm.xlu0 %850, %v533
          %v852 = vpop.permute.xlu0 %851
          %v854 = vrot.slane %v538, 7
          %v856 = vmul.f32 %v852, %v854
          %v857 = vadd.f32 %v849, %v856
          %858 = vset.pattern.permute.xlu0 40
          %859 = vperm.xlu0 %858, %v533
          %v860 = vpop.permute.xlu0 %859
          %v862 = vmul.f32 %v860, %v539
          %v863 = vadd.f32 %v857, %v862
          %864 = vset.pattern.permute.xlu0 41
          %865 = vperm.xlu0 %864, %v533
          %v866 = vpop.permute.xlu0 %865
          %v869 = vrot.slane %v539, 1
          %v871 = vmul.f32 %v866, %v869
          %v872 = vadd.f32 %v863, %v871
          %873 = vset.pattern.permute.xlu0 42
          %874 = vperm.xlu0 %873, %v533
          %v875 = vpop.permute.xlu0 %874
          %v877 = vrot.slane %v539, 2
          %v879 = vmul.f32 %v875, %v877
          %v880 = vadd.f32 %v872, %v879
          %881 = vset.pattern.permute.xlu0 43
          %882 = vperm.xlu0 %881, %v533
          %v883 = vpop.permute.xlu0 %882
          %v885 = vrot.slane %v539, 3
          %v887 = vmul.f32 %v883, %v885
          %v888 = vadd.f32 %v880, %v887
          %889 = vset.pattern.permute.xlu0 44
          %890 = vperm.xlu0 %889, %v533
          %v891 = vpop.permute.xlu0 %890
          %v893 = vrot.slane %v539, 4
          %v895 = vmul.f32 %v891, %v893
          %v896 = vadd.f32 %v888, %v895
          %897 = vset.pattern.permute.xlu0 45
          %898 = vperm.xlu0 %897, %v533
          %v899 = vpop.permute.xlu0 %898
          %v901 = vrot.slane %v539, 5
          %v903 = vmul.f32 %v899, %v901
          %v904 = vadd.f32 %v896, %v903
          %905 = vset.pattern.permute.xlu0 46
          %906 = vperm.xlu0 %905, %v533
          %v907 = vpop.permute.xlu0 %906
          %v909 = vrot.slane %v539, 6
          %v911 = vmul.f32 %v907, %v909
          %v912 = vadd.f32 %v904, %v911
          %913 = vset.pattern.permute.xlu0 47
          %914 = vperm.xlu0 %913, %v533
          %v915 = vpop.permute.xlu0 %914
          %v917 = vrot.slane %v539, 7
          %v919 = vmul.f32 %v915, %v917
          %v920 = vadd.f32 %v912, %v919
          %v921 = vmax.f32 %v920, 0.0
          %922 = vst [vmem:[%s195] sm:$0x1] %v921
        $region44: #{tpu_custom_call.1} parent=31 // pred_fallthru
          _
        %s923 = sand.u32 %s108, 1
        %s924 = scalar_lea.sflag [#allocation5], %s923
        %s925 = sand.u32 %s108, 1
        %s926 = scalar_lea.vmem [#allocation6], %s925
        // Predicated region
        $region45: #{tpu_custom_call.1} parent=31 // pred_check
          %p927 = pneg %p118
        $region46: #{tpu_custom_call.1} parent=31 // pred_check_branch
          %929 = sbr.rel (%p927) target = $region48
        $region47: #{tpu_custom_call.1} parent=31 // pred_region
          %s931 = ssub.s32 16, 16
          %932 = vsyncadd %s924, %s931
          %s933 = smul.addr %s22, 16
          %s934 = scalar_lea.hbm %s3, %s933
          %s936 = sshll.u32 %s926, 4
          %s937 = int_to_ptr.vmem [resolvable:$true] %s936
          %939 = dma.vmem_to_hbm [thread:$0]  %s937, 16, %s934, %s924
        $region48: #{tpu_custom_call.1} parent=31 // pred_fallthru
          _
      $region32: #{tpu_custom_call.1} parent=5 // pred_fallthru
        _
      %p940 = scmp.le.s32.totalorder 2, %s13
      // Predicated region
      $region49: #{tpu_custom_call.1} parent=5 // pred_check
        %p941 = pneg %p940
      $region50: #{tpu_custom_call.1} parent=5 // pred_check_branch
        %943 = sbr.rel (%p941) target = $region52
      $region51: #{tpu_custom_call.1} parent=5 // pred_region
        %s944 = ssub.s32 %s13, 2
        // Predicated region
        $region53: #{tpu_custom_call.1} parent=51 // pred_check
          %p945 = pneg %p124
        $region54: #{tpu_custom_call.1} parent=51 // pred_check_branch
          %947 = sbr.rel (%p945) target = $region56
        $region55: #{tpu_custom_call.1} parent=51 // pred_region
          %s948 = sand.u32 %s109, 1
          %s949 = scalar_lea.sflag [#allocation5], %s948
          %s950 = sand.u32 %s109, 1
          %s951 = scalar_lea.vmem [#allocation6], %s950
          %952 = dma.done %s949, 16
        $region56: #{tpu_custom_call.1} parent=51 // pred_fallthru
          _
      $region52: #{tpu_custom_call.1} parent=5 // pred_fallthru
        _
    $region6: #{tpu_custom_call.1} parent=1 // loop_footer
      %s17 = sadd.s32 1, %s13
    $region7: #{tpu_custom_call.1} parent=1 // loop_footer_branch
      %12 = sbr.rel target = $region3
    $region8: #{tpu_custom_call.1} parent=1 // loop_exit
      _
    %953 = vsyncpa [#allocation4], 1
    %s954 = scalar_lea.sflag [#allocation4], 1
    %955 = vsyncpa %s954, 1
    %956 = vsyncpa [#allocation5], 1
    %s957 = scalar_lea.sflag [#allocation5], 1
    %958 = vsyncpa %s957, 1

</llo_original>
